<compile_context>
chip_gen: v7x
topology: tpu7x:2x2x1
jax: 0.10.0
libtpu: 0.0.40
codegen_flags: <defaults>
</compile_context>

<pallas_src>
import functools

import jax
import jax.numpy as jnp
from jax.experimental import pallas as pl
from jax.experimental.pallas import tpu as pltpu

N_PAD = 128  # lane-dense padded output width (num_classes <= 128)


def mlp_kernel(x_ref, w1_ref, b1_ref, w2_ref, b2_ref, w3_ref, b3_ref, o_ref):
    # fc1: bf16 inputs to the MXU, f32 accumulation, f32 bias-add + ReLU,
    # cast to bf16 in the epilogue for the next dot.
    h1 = jnp.dot(x_ref[...], w1_ref[...], preferred_element_type=jnp.float32)
    h1 = jnp.maximum(h1 + b1_ref[...], 0.0).astype(jnp.bfloat16)
    # fc2
    h2 = jnp.dot(h1, w2_ref[...], preferred_element_type=jnp.float32)
    h2 = jnp.maximum(h2 + b2_ref[...], 0.0).astype(jnp.bfloat16)
    # fc3 (no activation); N padded to 128 so the store is lane-dense.
    out = jnp.dot(h2, w3_ref[...], preferred_element_type=jnp.float32)
    o_ref[...] = (out + b3_ref[...]).astype(o_ref.dtype)


def init_params(key, input_size, num_classes):
    """Deterministic f32 init (Kaiming-uniform-like scaling, as in nn.Linear)."""
    def linear(k, fan_in, fan_out):
        kw, kb = jax.random.split(k)
        bound = 1.0 / jnp.sqrt(fan_in)
        w = jax.random.uniform(kw, (fan_in, fan_out), jnp.float32, -bound, bound)
        b = jax.random.uniform(kb, (1, fan_out), jnp.float32, -bound, bound)
        return w, b

    k1, k2, k3 = jax.random.split(key, 3)
    w1, b1 = linear(k1, input_size, 512)
    w2, b2 = linear(k2, 512, 256)
    w3, b3 = linear(k3, 256, num_classes)
    return {"w1": w1, "b1": b1, "w2": w2, "b2": b2, "w3": w3, "b3": b3}


def prepare_params(params):
    """Cast weights to bf16 and pad fc3's output dim to N_PAD lanes."""
    num_classes = params["w3"].shape[1]
    pad = N_PAD - num_classes
    w3p = jnp.pad(params["w3"], ((0, 0), (0, pad)))
    b3p = jnp.pad(params["b3"], ((0, 0), (0, pad)))
    return {
        "w1": params["w1"].astype(jnp.bfloat16),
        "b1": params["b1"].astype(jnp.float32),
        "w2": params["w2"].astype(jnp.bfloat16),
        "b2": params["b2"].astype(jnp.float32),
        "w3": w3p.astype(jnp.bfloat16),
        "b3": b3p.astype(jnp.float32),
        "num_classes": num_classes,
    }


@functools.partial(jax.jit, static_argnames=("num_classes", "tb"))
def _model1_pallas(x, w1, b1, w2, b2, w3, b3, *, num_classes, tb):
    B, D = x.shape
    n_pad = w3.shape[1]

    # bf16 activations into the MXU (no-op if the caller already passes bf16).
    x = x.astype(jnp.bfloat16)

    # Batch tile: a single full-extent block for tiny batches; otherwise a
    # multiple of 16 (bf16 sublane packing), capped at `tb`, and chosen so the
    # grid has >= 2 steps (keeps both v7x TensorCores busy on the parallel axis).
    if B < 32:
        TB = B
    else:
        TB = min(tb, ((B + 1) // 2 + 15) // 16 * 16)
    n_blocks = pl.cdiv(B, TB)
    rows = n_blocks * TB  # padded output rows; extras are sliced off below

    flops = 2 * rows * (D * 512 + 512 * 256 + 256 * n_pad)
    bytes_accessed = (
        B * D * 2 + rows * n_pad * 2                 # bf16 x in, bf16 out
        + (w1.size + w2.size + w3.size) * 2          # bf16 weights
        + (b1.size + b2.size + b3.size) * 4          # f32 biases
    )
    cost = pl.CostEstimate(flops=flops, transcendentals=0,
                           bytes_accessed=bytes_accessed)

    const_spec = lambda shape: pl.BlockSpec(shape, lambda i: (0, 0))

    out = pl.pallas_call(
        mlp_kernel,
        out_shape=jax.ShapeDtypeStruct((rows, n_pad), jnp.bfloat16),
        grid_spec=pltpu.PrefetchScalarGridSpec(
            num_scalar_prefetch=0,
            grid=(n_blocks,),
            in_specs=[
                pl.BlockSpec((TB, D), lambda i: (i, 0)),   # x: tiled over batch
                const_spec(w1.shape),                      # weights stay resident
                const_spec(b1.shape),
                const_spec(w2.shape),
                const_spec(b2.shape),
                const_spec(w3.shape),
                const_spec(b3.shape),
            ],
            out_specs=pl.BlockSpec((TB, n_pad), lambda i: (i, 0)),
        ),
        compiler_params=pltpu.CompilerParams(
            dimension_semantics=("parallel",),  # shard batch tiles across TCs
        ),
        cost_estimate=cost,
    )(x, w1, b1, w2, b2, w3, b3)

    # Drop padded rows/columns; return f32 logits like the PyTorch model.
    return out[:B, :num_classes].astype(jnp.float32)


def model1_forward(x, prepared, tb=512):
    """x: (B, D_in), f32 or bf16. prepared: output of prepare_params()."""
    return _model1_pallas(
        x, prepared["w1"], prepared["b1"], prepared["w2"], prepared["b2"],
        prepared["w3"], prepared["b3"],
        num_classes=prepared["num_classes"], tb=tb)


def ref_forward_bf16(x, prepared):
    """Plain-JAX reference using the same bf16-weight / f32-accum recipe."""
    xb = x.astype(jnp.bfloat16)
    h1 = jnp.maximum(
        jnp.dot(xb, prepared["w1"], preferred_element_type=jnp.float32)
        + prepared["b1"], 0.0).astype(jnp.bfloat16)
    h2 = jnp.maximum(
        jnp.dot(h1, prepared["w2"], preferred_element_type=jnp.float32)
        + prepared["b2"], 0.0).astype(jnp.bfloat16)
    out = (jnp.dot(h2, prepared["w3"], preferred_element_type=jnp.float32)
           + prepared["b3"]).astype(jnp.bfloat16)
    return out[:, :prepared["num_classes"]].astype(jnp.float32)


def ref_forward_f32(x, params):
    """True f32 Model1 forward (matches the PyTorch module numerics)."""
    h1 = jnp.maximum(x @ params["w1"] + params["b1"], 0.0)
    h2 = jnp.maximum(h1 @ params["w2"] + params["b2"], 0.0)
    return h2 @ params["w3"] + params["b3"]


if __name__ == "__main__":
    # Small shapes consistent with the module: batch=2, a flattened "image"
    # of 3*16*16 = 768 features, 10 classes.
    B = 2
    C, H, W = 3, 16, 16
    input_size = C * H * W
    num_classes = 10

    key = jax.random.PRNGKey(0)
    k_x, k_p = jax.random.split(key)

    x_img = jax.random.normal(k_x, (B, C, H, W), jnp.float32)  # NCHW like PyTorch
    x = x_img.reshape(B, -1)                                   # x.view(B, -1)

    params = init_params(k_p, input_size, num_classes)
    prepared = prepare_params(params)

    out = model1_forward(x, prepared)
    jax.block_until_ready(out)
    assert out.shape == (B, num_classes), out.shape
    assert out.dtype == jnp.float32, out.dtype

    # Tight check: same bf16-weight / f32-accum recipe as the kernel.
    ref_b = ref_forward_bf16(x, prepared)
    assert jnp.allclose(out, ref_b, atol=3e-2, rtol=3e-2), (
        float(jnp.max(jnp.abs(out - ref_b))))

    # Looser check against the true f32 Model1 forward (bf16 weights introduce
    # ~1e-2-level error vs. the f32 reference).
    ref_f = ref_forward_f32(x, params)
    assert jnp.allclose(out, ref_f, atol=5e-2, rtol=5e-2), (
        float(jnp.max(jnp.abs(out - ref_f))))

    print("KERNEL_OK")
</pallas_src>

<mosaic_0001>
module attributes {stable_mosaic.version = 11 : i64} {
  func.func @mlp_kernel(%arg0: i32, %arg1: memref<2x768xbf16, #tpu.memory_space<vmem>>, %arg2: memref<768x512xbf16, #tpu.memory_space<vmem>>, %arg3: memref<1x512xf32, #tpu.memory_space<vmem>>, %arg4: memref<512x256xbf16, #tpu.memory_space<vmem>>, %arg5: memref<1x256xf32, #tpu.memory_space<vmem>>, %arg6: memref<256x128xbf16, #tpu.memory_space<vmem>>, %arg7: memref<1x128xf32, #tpu.memory_space<vmem>>, %arg8: memref<2x128xbf16, #tpu.memory_space<vmem>>) attributes {dimension_semantics = [#tpu.dimension_semantics<parallel>], iteration_bounds = array<i64: 1>, scalar_prefetch = 0 : i64, scratch_operands = 0 : i64, tpu.core_type = #tpu.core_type<tc>, window_params = [{transform_indices = @transform_0, window_bounds = array<i64: 2, 768>}, {pipeline_mode = #tpu.pipeline_mode<synchronous>, transform_indices = @transform_1, window_bounds = array<i64: 768, 512>}, {pipeline_mode = #tpu.pipeline_mode<synchronous>, transform_indices = @transform_2, window_bounds = array<i64: 1, 512>}, {pipeline_mode = #tpu.pipeline_mode<synchronous>, transform_indices = @transform_3, window_bounds = array<i64: 512, 256>}, {pipeline_mode = #tpu.pipeline_mode<synchronous>, transform_indices = @transform_4, window_bounds = array<i64: 1, 256>}, {pipeline_mode = #tpu.pipeline_mode<synchronous>, transform_indices = @transform_5, window_bounds = array<i64: 256, 128>}, {pipeline_mode = #tpu.pipeline_mode<synchronous>, transform_indices = @transform_6, window_bounds = array<i64: 1, 128>}, {transform_indices = @transform_7, window_bounds = array<i64: 2, 128>}]} {
    %c0 = arith.constant 0 : index
    %c0_0 = arith.constant 0 : index
    %0 = vector.load %arg1[%c0, %c0_0] : memref<2x768xbf16, #tpu.memory_space<vmem>>, vector<2x768xbf16>
    %c0_1 = arith.constant 0 : index
    %c0_2 = arith.constant 0 : index
    %1 = vector.load %arg2[%c0_1, %c0_2] : memref<768x512xbf16, #tpu.memory_space<vmem>>, vector<768x512xbf16>
    %cst = arith.constant dense<0.000000e+00> : vector<2x512xf32>
    %2 = tpu.matmul %0, %1, %cst {dimension_numbers = #tpu.dot_dimension_numbers<[1], [0], [0], [1], [0, 0, 1, 1], [], []>} : vector<2x768xbf16>, vector<768x512xbf16>, vector<2x512xf32> -> vector<2x512xf32>
    %c0_3 = arith.constant 0 : index
    %c0_4 = arith.constant 0 : index
    %3 = vector.load %arg3[%c0_3, %c0_4] : memref<1x512xf32, #tpu.memory_space<vmem>>, vector<1x512xf32>
    %4 = vector.broadcast %3 : vector<1x512xf32> to vector<2x512xf32>
    %5 = arith.addf %2, %4 : vector<2x512xf32>
    %cst_5 = arith.constant 0.000000e+00 : f32
    %6 = vector.broadcast %cst_5 : f32 to vector<2x512xf32>
    %7 = arith.maximumf %5, %6 : vector<2x512xf32>
    %8 = arith.truncf %7 : vector<2x512xf32> to vector<2x512xbf16>
    %c0_6 = arith.constant 0 : index
    %c0_7 = arith.constant 0 : index
    %9 = vector.load %arg4[%c0_6, %c0_7] : memref<512x256xbf16, #tpu.memory_space<vmem>>, vector<512x256xbf16>
    %cst_8 = arith.constant dense<0.000000e+00> : vector<2x256xf32>
    %10 = tpu.matmul %8, %9, %cst_8 {dimension_numbers = #tpu.dot_dimension_numbers<[1], [0], [0], [1], [0, 0, 1, 1], [], []>} : vector<2x512xbf16>, vector<512x256xbf16>, vector<2x256xf32> -> vector<2x256xf32>
    %c0_9 = arith.constant 0 : index
    %c0_10 = arith.constant 0 : index
    %11 = vector.load %arg5[%c0_9, %c0_10] : memref<1x256xf32, #tpu.memory_space<vmem>>, vector<1x256xf32>
    %12 = vector.broadcast %11 : vector<1x256xf32> to vector<2x256xf32>
    %13 = arith.addf %10, %12 : vector<2x256xf32>
    %cst_11 = arith.constant 0.000000e+00 : f32
    %14 = vector.broadcast %cst_11 : f32 to vector<2x256xf32>
    %15 = arith.maximumf %13, %14 : vector<2x256xf32>
    %16 = arith.truncf %15 : vector<2x256xf32> to vector<2x256xbf16>
    %c0_12 = arith.constant 0 : index
    %c0_13 = arith.constant 0 : index
    %17 = vector.load %arg6[%c0_12, %c0_13] : memref<256x128xbf16, #tpu.memory_space<vmem>>, vector<256x128xbf16>
    %cst_14 = arith.constant dense<0.000000e+00> : vector<2x128xf32>
    %18 = tpu.matmul %16, %17, %cst_14 {dimension_numbers = #tpu.dot_dimension_numbers<[1], [0], [0], [1], [0, 0, 1, 1], [], []>} : vector<2x256xbf16>, vector<256x128xbf16>, vector<2x128xf32> -> vector<2x128xf32>
    %c0_15 = arith.constant 0 : index
    %c0_16 = arith.constant 0 : index
    %19 = vector.load %arg7[%c0_15, %c0_16] : memref<1x128xf32, #tpu.memory_space<vmem>>, vector<1x128xf32>
    %20 = vector.broadcast %19 : vector<1x128xf32> to vector<2x128xf32>
    %21 = arith.addf %18, %20 : vector<2x128xf32>
    %22 = arith.truncf %21 : vector<2x128xf32> to vector<2x128xbf16>
    %c0_17 = arith.constant 0 : index
    %c0_18 = arith.constant 0 : index
    %23 = vector.load %arg8[%c0_17, %c0_18] : memref<2x128xbf16, #tpu.memory_space<vmem>>, vector<2x128xbf16>
    tpu.vector_store %arg8[%c0_17, %c0_18], %22 {strides = array<i32>} : memref<2x128xbf16, #tpu.memory_space<vmem>>, vector<2x128xbf16>,
    return
  }
  func.func @transform_0(%arg0: i32) -> (i32, i32) {
    %c0_i32 = arith.constant 0 : i32
    %c0_i32_0 = arith.constant 0 : i32
    return %arg0, %c0_i32 : i32, i32
  }
  func.func @transform_1(%arg0: i32) -> (i32, i32) {
    %c0_i32 = arith.constant 0 : i32
    %c0_i32_0 = arith.constant 0 : i32
    %c0_i32_1 = arith.constant 0 : i32
    return %c0_i32, %c0_i32_0 : i32, i32
  }
  func.func @transform_2(%arg0: i32) -> (i32, i32) {
    %c0_i32 = arith.constant 0 : i32
    %c0_i32_0 = arith.constant 0 : i32
    %c0_i32_1 = arith.constant 0 : i32
    return %c0_i32, %c0_i32_0 : i32, i32
  }
  func.func @transform_3(%arg0: i32) -> (i32, i32) {
    %c0_i32 = arith.constant 0 : i32
    %c0_i32_0 = arith.constant 0 : i32
    %c0_i32_1 = arith.constant 0 : i32
    return %c0_i32, %c0_i32_0 : i32, i32
  }
  func.func @transform_4(%arg0: i32) -> (i32, i32) {
    %c0_i32 = arith.constant 0 : i32
    %c0_i32_0 = arith.constant 0 : i32
    %c0_i32_1 = arith.constant 0 : i32
    return %c0_i32, %c0_i32_0 : i32, i32
  }
  func.func @transform_5(%arg0: i32) -> (i32, i32) {
    %c0_i32 = arith.constant 0 : i32
    %c0_i32_0 = arith.constant 0 : i32
    %c0_i32_1 = arith.constant 0 : i32
    return %c0_i32, %c0_i32_0 : i32, i32
  }
  func.func @transform_6(%arg0: i32) -> (i32, i32) {
    %c0_i32 = arith.constant 0 : i32
    %c0_i32_0 = arith.constant 0 : i32
    %c0_i32_1 = arith.constant 0 : i32
    return %c0_i32, %c0_i32_0 : i32, i32
  }
  func.func @transform_7(%arg0: i32) -> (i32, i32) {
    %c0_i32 = arith.constant 0 : i32
    %c0_i32_0 = arith.constant 0 : i32
    return %arg0, %c0_i32 : i32, i32
  }
}

</mosaic_0001>

<llo_original>
// kernel: _model1_pallas.1
$region0: #{_model1_pallas.1}
  #allocation0 [shape = 'u32[]', space=smem, size = 0x4, offset = 0x4, fixed_abs, tag = 'smem constant byte address 0x4 - core index']
  #allocation1 [shape = 'u32[144,128]{1,0:T(1,128)}', space=vmem, size = 0x12000, scoped, tag = 'internal scratch']
  %s0 = inlined_call_operand.vmem [shape: bf16[2,768], index: 0, kind: input, shape index: {}]
  %s1 = inlined_call_operand.hbm [shape: bf16[768,512], index: 1, kind: input, shape index: {}]
  %s2 = inlined_call_operand.vmem [shape: f32[1,512], index: 2, kind: input, shape index: {}]
  %s3 = inlined_call_operand.hbm [shape: bf16[512,256], index: 3, kind: input, shape index: {}]
  %s4 = inlined_call_operand.vmem [shape: f32[1,256], index: 4, kind: input, shape index: {}]
  %s5 = inlined_call_operand.hbm [shape: bf16[256,128], index: 5, kind: input, shape index: {}]
  %s6 = inlined_call_operand.vmem [shape: f32[1,128], index: 6, kind: input, shape index: {}]
  %s7 = inlined_call_operand.vmem [shape: bf16[2,128], index: 7, kind: output, shape index: {}]
  %s8 = sld [smem:[#allocation0]]
  $region50: #{_model1_pallas.1} parent=0
    _
  %s10 = ssub.s32 1, %s8
  %s11 = scalar_select 0, %s10, %s8
  $region1: #{_model1_pallas.1} parent=0
    #allocation2 [shape = 'u8[786432]{0}', space=vmem, size = 0xc0000, scoped, tag = 'input window, operand 1, single buffered']
    #allocation3 [shape = 's32[1]{0}', space=sflag, size = 0x4, scoped, tag = 'scoped memory for _model1_pallas.1']
    #allocation4 [shape = 'u8[262144]{0}', space=vmem, size = 0x40000, scoped, tag = 'input window, operand 3, single buffered']
    #allocation5 [shape = 's32[1]{0}', space=sflag, size = 0x4, scoped, tag = 'scoped memory for _model1_pallas.1']
    #allocation6 [shape = 'u8[65536]{0}', space=vmem, size = 0x10000, scoped, tag = 'input window, operand 5, single buffered']
    %12 = vsyncpa [#allocation3], 0
    %13 = vsyncpa [#allocation5], 0
    // Predicated region
    $region2: #{_model1_pallas.1} parent=1 // pred_check
      _
    $region3: #{_model1_pallas.1} parent=1 // pred_check_branch
      %15 = sbr.rel (0) target = $region5
    $region4: #{_model1_pallas.1} parent=1 // pred_region
      _
    $region5: #{_model1_pallas.1} parent=1 // pred_fallthru
      _
    // Predicated region
    $region6: #{_model1_pallas.1} parent=1 // pred_check
      _
    $region7: #{_model1_pallas.1} parent=1 // pred_check_branch
      %17 = sbr.rel (0) target = $region9
    $region8: #{_model1_pallas.1} parent=1 // pred_region
      %s19 = ssub.s32 24576, 24576
      %20 = vsyncadd [#allocation3], %s19
      %s21 = sshll.u32 [#allocation2], 4
      %s22 = int_to_ptr.vmem [resolvable:$true] %s21
      %27 = dma.hbm_to_vmem [thread:$0]  %s1, 24576, %s22, [#allocation3], 256, 256, 16
    $region9: #{_model1_pallas.1} parent=1 // pred_fallthru
      _
    // Predicated region
    $region10: #{_model1_pallas.1} parent=1 // pred_check
      _
    $region11: #{_model1_pallas.1} parent=1 // pred_check_branch
      %29 = sbr.rel (0) target = $region13
    $region12: #{_model1_pallas.1} parent=1 // pred_region
      _
    $region13: #{_model1_pallas.1} parent=1 // pred_fallthru
      _
    // Predicated region
    $region14: #{_model1_pallas.1} parent=1 // pred_check
      _
    $region15: #{_model1_pallas.1} parent=1 // pred_check_branch
      %31 = sbr.rel (0) target = $region17
    $region16: #{_model1_pallas.1} parent=1 // pred_region
      %s33 = ssub.s32 8192, 8192
      %34 = vsyncadd [#allocation5], %s33
      %s35 = sshll.u32 [#allocation4], 4
      %s36 = int_to_ptr.vmem [resolvable:$true] %s35
      %41 = dma.hbm_to_vmem [thread:$0]  %s3, 8192, %s36, [#allocation5], 128, 128, 8
    $region17: #{_model1_pallas.1} parent=1 // pred_fallthru
      _
    // Predicated region
    $region18: #{_model1_pallas.1} parent=1 // pred_check
      _
    $region19: #{_model1_pallas.1} parent=1 // pred_check_branch
      %43 = sbr.rel (0) target = $region21
    $region20: #{_model1_pallas.1} parent=1 // pred_region
      _
    $region21: #{_model1_pallas.1} parent=1 // pred_fallthru
      _
    // Predicated region
    $region22: #{_model1_pallas.1} parent=1 // pred_check
      _
    $region23: #{_model1_pallas.1} parent=1 // pred_check_branch
      %45 = sbr.rel (0) target = $region25
    $region24: #{_model1_pallas.1} parent=1 // pred_region
      %s47 = ssub.s32 2048, 2048
      %48 = vsyncadd [#allocation5], %s47
      %s49 = sshll.u32 [#allocation6], 4
      %s50 = int_to_ptr.vmem [resolvable:$true] %s49
      %55 = dma.hbm_to_vmem [thread:$0]  %s5, 2048, %s50, [#allocation5], 64, 64, 4
    $region25: #{_model1_pallas.1} parent=1 // pred_fallthru
      _
    // Predicated region
    $region26: #{_model1_pallas.1} parent=1 // pred_check
      _
    $region27: #{_model1_pallas.1} parent=1 // pred_check_branch
      %57 = sbr.rel (0) target = $region29
    $region28: #{_model1_pallas.1} parent=1 // pred_region
      _
    $region29: #{_model1_pallas.1} parent=1 // pred_fallthru
      _
    // Predicated region
    $region30: #{_model1_pallas.1} parent=1 // pred_check
      _
    $region31: #{_model1_pallas.1} parent=1 // pred_check_branch
      %59 = sbr.rel (0) target = $region33
    $region32: #{_model1_pallas.1} parent=1 // pred_region
      %60 = dma.done [#allocation3], 24576
    $region33: #{_model1_pallas.1} parent=1 // pred_fallthru
      _
    // Predicated region
    $region34: #{_model1_pallas.1} parent=1 // pred_check
      _
    $region35: #{_model1_pallas.1} parent=1 // pred_check_branch
      %62 = sbr.rel (0) target = $region37
    $region36: #{_model1_pallas.1} parent=1 // pred_region
      %63 = dma.done [#allocation5], 8192
    $region37: #{_model1_pallas.1} parent=1 // pred_fallthru
      _
    // Predicated region
    $region38: #{_model1_pallas.1} parent=1 // pred_check
      _
    $region39: #{_model1_pallas.1} parent=1 // pred_check_branch
      %65 = sbr.rel (0) target = $region41
    $region40: #{_model1_pallas.1} parent=1 // pred_region
      %66 = dma.done [#allocation5], 2048
    $region41: #{_model1_pallas.1} parent=1 // pred_fallthru
      _
    %v68 = vld [vmem:[%s0] sm:$0x3f]
    %v69 = vld [vmem:[#allocation2] sm:$0xff]
    %v70 = vld [vmem:[#allocation2 + $0x8] sm:$0xff]
    %v71 = vld [vmem:[#allocation2 + $0x10] sm:$0xff]
    %v72 = vld [vmem:[#allocation2 + $0x18] sm:$0xff]
    %v73 = vld [vmem:[#allocation2 + $0x20] sm:$0xff]
    %v74 = vld [vmem:[#allocation2 + $0x28] sm:$0xff]
    %v75 = vld [vmem:[#allocation2 + $0x30] sm:$0xff]
    %v76 = vld [vmem:[#allocation2 + $0x38] sm:$0xff]
    %v77 = vld [vmem:[#allocation2 + $0x40] sm:$0xff]
    %v78 = vld [vmem:[#allocation2 + $0x48] sm:$0xff]
    %v79 = vld [vmem:[#allocation2 + $0x50] sm:$0xff]
    %v80 = vld [vmem:[#allocation2 + $0x58] sm:$0xff]
    %v81 = vld [vmem:[#allocation2 + $0x60] sm:$0xff]
    %v82 = vld [vmem:[#allocation2 + $0x68] sm:$0xff]
    %v83 = vld [vmem:[#allocation2 + $0x70] sm:$0xff]
    %v84 = vld [vmem:[#allocation2 + $0x78] sm:$0xff]
    %v85 = vld [vmem:[#allocation2 + $0x80] sm:$0xff]
    %v86 = vld [vmem:[#allocation2 + $0x88] sm:$0xff]
    %v87 = vld [vmem:[#allocation2 + $0x90] sm:$0xff]
    %v88 = vld [vmem:[#allocation2 + $0x98] sm:$0xff]
    %v89 = vld [vmem:[#allocation2 + $0xa0] sm:$0xff]
    %v90 = vld [vmem:[#allocation2 + $0xa8] sm:$0xff]
    %v91 = vld [vmem:[#allocation2 + $0xb0] sm:$0xff]
    %v92 = vld [vmem:[#allocation2 + $0xb8] sm:$0xff]
    %v93 = vld [vmem:[#allocation2 + $0xc0] sm:$0xff]
    %v94 = vld [vmem:[#allocation2 + $0xc8] sm:$0xff]
    %v95 = vld [vmem:[#allocation2 + $0xd0] sm:$0xff]
    %v96 = vld [vmem:[#allocation2 + $0xd8] sm:$0xff]
    %v97 = vld [vmem:[#allocation2 + $0xe0] sm:$0xff]
    %v98 = vld [vmem:[#allocation2 + $0xe8] sm:$0xff]
    %v99 = vld [vmem:[#allocation2 + $0xf0] sm:$0xff]
    %v100 = vld [vmem:[#allocation2 + $0xf8] sm:$0xff]
    %v101 = vld [vmem:[#allocation2 + $0x100] sm:$0xff]
    %v102 = vld [vmem:[#allocation2 + $0x108] sm:$0xff]
    %v103 = vld [vmem:[#allocation2 + $0x110] sm:$0xff]
    %v104 = vld [vmem:[#allocation2 + $0x118] sm:$0xff]
    %v105 = vld [vmem:[#allocation2 + $0x120] sm:$0xff]
    %v106 = vld [vmem:[#allocation2 + $0x128] sm:$0xff]
    %v107 = vld [vmem:[#allocation2 + $0x130] sm:$0xff]
    %v108 = vld [vmem:[#allocation2 + $0x138] sm:$0xff]
    %v109 = vld [vmem:[#allocation2 + $0x140] sm:$0xff]
    %v110 = vld [vmem:[#allocation2 + $0x148] sm:$0xff]
    %v111 = vld [vmem:[#allocation2 + $0x150] sm:$0xff]
    %v112 = vld [vmem:[#allocation2 + $0x158] sm:$0xff]
    %v113 = vld [vmem:[#allocation2 + $0x160] sm:$0xff]
    %v114 = vld [vmem:[#allocation2 + $0x168] sm:$0xff]
    %v115 = vld [vmem:[#allocation2 + $0x170] sm:$0xff]
    %v116 = vld [vmem:[#allocation2 + $0x178] sm:$0xff]
    %v117 = vld [vmem:[#allocation2 + $0x180] sm:$0xff]
    %v118 = vld [vmem:[#allocation2 + $0x188] sm:$0xff]
    %v119 = vld [vmem:[#allocation2 + $0x190] sm:$0xff]
    %v120 = vld [vmem:[#allocation2 + $0x198] sm:$0xff]
    %v121 = vld [vmem:[#allocation2 + $0x1a0] sm:$0xff]
    %v122 = vld [vmem:[#allocation2 + $0x1a8] sm:$0xff]
    %v123 = vld [vmem:[#allocation2 + $0x1b0] sm:$0xff]
    %v124 = vld [vmem:[#allocation2 + $0x1b8] sm:$0xff]
    %v125 = vld [vmem:[#allocation2 + $0x1c0] sm:$0xff]
    %v126 = vld [vmem:[#allocation2 + $0x1c8] sm:$0xff]
    %v127 = vld [vmem:[#allocation2 + $0x1d0] sm:$0xff]
    %v128 = vld [vmem:[#allocation2 + $0x1d8] sm:$0xff]
    %v129 = vld [vmem:[#allocation2 + $0x1e0] sm:$0xff]
    %v130 = vld [vmem:[#allocation2 + $0x1e8] sm:$0xff]
    %v131 = vld [vmem:[#allocation2 + $0x1f0] sm:$0xff]
    %v132 = vld [vmem:[#allocation2 + $0x1f8] sm:$0xff]
    %v133 = vld [vmem:[#allocation2 + $0x200] sm:$0xff]
    %v134 = vld [vmem:[#allocation2 + $0x208] sm:$0xff]
    %v135 = vld [vmem:[#allocation2 + $0x210] sm:$0xff]
    %v136 = vld [vmem:[#allocation2 + $0x218] sm:$0xff]
    %v137 = vld [vmem:[#allocation2 + $0x220] sm:$0xff]
    %v138 = vld [vmem:[#allocation2 + $0x228] sm:$0xff]
    %v139 = vld [vmem:[#allocation2 + $0x230] sm:$0xff]
    %v140 = vld [vmem:[#allocation2 + $0x238] sm:$0xff]
    %v141 = vld [vmem:[#allocation2 + $0x240] sm:$0xff]
    %v142 = vld [vmem:[#allocation2 + $0x248] sm:$0xff]
    %v143 = vld [vmem:[#allocation2 + $0x250] sm:$0xff]
    %v144 = vld [vmem:[#allocation2 + $0x258] sm:$0xff]
    %v145 = vld [vmem:[#allocation2 + $0x260] sm:$0xff]
    %v146 = vld [vmem:[#allocation2 + $0x268] sm:$0xff]
    %v147 = vld [vmem:[#allocation2 + $0x270] sm:$0xff]
    %v148 = vld [vmem:[#allocation2 + $0x278] sm:$0xff]
    %v149 = vld [vmem:[#allocation2 + $0x280] sm:$0xff]
    %v150 = vld [vmem:[#allocation2 + $0x288] sm:$0xff]
    %v151 = vld [vmem:[#allocation2 + $0x290] sm:$0xff]
    %v152 = vld [vmem:[#allocation2 + $0x298] sm:$0xff]
    %v153 = vld [vmem:[#allocation2 + $0x2a0] sm:$0xff]
    %v154 = vld [vmem:[#allocation2 + $0x2a8] sm:$0xff]
    %v155 = vld [vmem:[#allocation2 + $0x2b0] sm:$0xff]
    %v156 = vld [vmem:[#allocation2 + $0x2b8] sm:$0xff]
    %v157 = vld [vmem:[#allocation2 + $0x2c0] sm:$0xff]
    %v158 = vld [vmem:[#allocation2 + $0x2c8] sm:$0xff]
    %v159 = vld [vmem:[#allocation2 + $0x2d0] sm:$0xff]
    %v160 = vld [vmem:[#allocation2 + $0x2d8] sm:$0xff]
    %v161 = vld [vmem:[#allocation2 + $0x2e0] sm:$0xff]
    %v162 = vld [vmem:[#allocation2 + $0x2e8] sm:$0xff]
    %v163 = vld [vmem:[#allocation2 + $0x2f0] sm:$0xff]
    %v164 = vld [vmem:[#allocation2 + $0x2f8] sm:$0xff]
    %v165 = vld [vmem:[#allocation2 + $0x300] sm:$0xff]
    %v166 = vld [vmem:[#allocation2 + $0x308] sm:$0xff]
    %v167 = vld [vmem:[#allocation2 + $0x310] sm:$0xff]
    %v168 = vld [vmem:[#allocation2 + $0x318] sm:$0xff]
    %v169 = vld [vmem:[#allocation2 + $0x320] sm:$0xff]
    %v170 = vld [vmem:[#allocation2 + $0x328] sm:$0xff]
    %v171 = vld [vmem:[#allocation2 + $0x330] sm:$0xff]
    %v172 = vld [vmem:[#allocation2 + $0x338] sm:$0xff]
    %v173 = vld [vmem:[#allocation2 + $0x340] sm:$0xff]
    %v174 = vld [vmem:[#allocation2 + $0x348] sm:$0xff]
    %v175 = vld [vmem:[#allocation2 + $0x350] sm:$0xff]
    %v176 = vld [vmem:[#allocation2 + $0x358] sm:$0xff]
    %v177 = vld [vmem:[#allocation2 + $0x360] sm:$0xff]
    %v178 = vld [vmem:[#allocation2 + $0x368] sm:$0xff]
    %v179 = vld [vmem:[#allocation2 + $0x370] sm:$0xff]
    %v180 = vld [vmem:[#allocation2 + $0x378] sm:$0xff]
    %v181 = vld [vmem:[#allocation2 + $0x380] sm:$0xff]
    %v182 = vld [vmem:[#allocation2 + $0x388] sm:$0xff]
    %v183 = vld [vmem:[#allocation2 + $0x390] sm:$0xff]
    %v184 = vld [vmem:[#allocation2 + $0x398] sm:$0xff]
    %v185 = vld [vmem:[#allocation2 + $0x3a0] sm:$0xff]
    %v186 = vld [vmem:[#allocation2 + $0x3a8] sm:$0xff]
    %v187 = vld [vmem:[#allocation2 + $0x3b0] sm:$0xff]
    %v188 = vld [vmem:[#allocation2 + $0x3b8] sm:$0xff]
    %v189 = vld [vmem:[#allocation2 + $0x3c0] sm:$0xff]
    %v190 = vld [vmem:[#allocation2 + $0x3c8] sm:$0xff]
    %v191 = vld [vmem:[#allocation2 + $0x3d0] sm:$0xff]
    %v192 = vld [vmem:[#allocation2 + $0x3d8] sm:$0xff]
    %v193 = vld [vmem:[#allocation2 + $0x3e0] sm:$0xff]
    %v194 = vld [vmem:[#allocation2 + $0x3e8] sm:$0xff]
    %v195 = vld [vmem:[#allocation2 + $0x3f0] sm:$0xff]
    %v196 = vld [vmem:[#allocation2 + $0x3f8] sm:$0xff]
    %v197 = vld [vmem:[#allocation2 + $0x400] sm:$0xff]
    %v198 = vld [vmem:[#allocation2 + $0x408] sm:$0xff]
    %v199 = vld [vmem:[#allocation2 + $0x410] sm:$0xff]
    %v200 = vld [vmem:[#allocation2 + $0x418] sm:$0xff]
    %v201 = vld [vmem:[#allocation2 + $0x420] sm:$0xff]
    %v202 = vld [vmem:[#allocation2 + $0x428] sm:$0xff]
    %v203 = vld [vmem:[#allocation2 + $0x430] sm:$0xff]
    %v204 = vld [vmem:[#allocation2 + $0x438] sm:$0xff]
    %v205 = vld [vmem:[#allocation2 + $0x440] sm:$0xff]
    %v206 = vld [vmem:[#allocation2 + $0x448] sm:$0xff]
    %v207 = vld [vmem:[#allocation2 + $0x450] sm:$0xff]
    %v208 = vld [vmem:[#allocation2 + $0x458] sm:$0xff]
    %v209 = vld [vmem:[#allocation2 + $0x460] sm:$0xff]
    %v210 = vld [vmem:[#allocation2 + $0x468] sm:$0xff]
    %v211 = vld [vmem:[#allocation2 + $0x470] sm:$0xff]
    %v212 = vld [vmem:[#allocation2 + $0x478] sm:$0xff]
    %v213 = vld [vmem:[#allocation2 + $0x480] sm:$0xff]
    %v214 = vld [vmem:[#allocation2 + $0x488] sm:$0xff]
    %v215 = vld [vmem:[#allocation2 + $0x490] sm:$0xff]
    %v216 = vld [vmem:[#allocation2 + $0x498] sm:$0xff]
    %v217 = vld [vmem:[#allocation2 + $0x4a0] sm:$0xff]
    %v218 = vld [vmem:[#allocation2 + $0x4a8] sm:$0xff]
    %v219 = vld [vmem:[#allocation2 + $0x4b0] sm:$0xff]
    %v220 = vld [vmem:[#allocation2 + $0x4b8] sm:$0xff]
    %v221 = vld [vmem:[#allocation2 + $0x4c0] sm:$0xff]
    %v222 = vld [vmem:[#allocation2 + $0x4c8] sm:$0xff]
    %v223 = vld [vmem:[#allocation2 + $0x4d0] sm:$0xff]
    %v224 = vld [vmem:[#allocation2 + $0x4d8] sm:$0xff]
    %v225 = vld [vmem:[#allocation2 + $0x4e0] sm:$0xff]
    %v226 = vld [vmem:[#allocation2 + $0x4e8] sm:$0xff]
    %v227 = vld [vmem:[#allocation2 + $0x4f0] sm:$0xff]
    %v228 = vld [vmem:[#allocation2 + $0x4f8] sm:$0xff]
    %v229 = vld [vmem:[#allocation2 + $0x500] sm:$0xff]
    %v230 = vld [vmem:[#allocation2 + $0x508] sm:$0xff]
    %v231 = vld [vmem:[#allocation2 + $0x510] sm:$0xff]
    %v232 = vld [vmem:[#allocation2 + $0x518] sm:$0xff]
    %v233 = vld [vmem:[#allocation2 + $0x520] sm:$0xff]
    %v234 = vld [vmem:[#allocation2 + $0x528] sm:$0xff]
    %v235 = vld [vmem:[#allocation2 + $0x530] sm:$0xff]
    %v236 = vld [vmem:[#allocation2 + $0x538] sm:$0xff]
    %v237 = vld [vmem:[#allocation2 + $0x540] sm:$0xff]
    %v238 = vld [vmem:[#allocation2 + $0x548] sm:$0xff]
    %v239 = vld [vmem:[#allocation2 + $0x550] sm:$0xff]
    %v240 = vld [vmem:[#allocation2 + $0x558] sm:$0xff]
    %v241 = vld [vmem:[#allocation2 + $0x560] sm:$0xff]
    %v242 = vld [vmem:[#allocation2 + $0x568] sm:$0xff]
    %v243 = vld [vmem:[#allocation2 + $0x570] sm:$0xff]
    %v244 = vld [vmem:[#allocation2 + $0x578] sm:$0xff]
    %v245 = vld [vmem:[#allocation2 + $0x580] sm:$0xff]
    %v246 = vld [vmem:[#allocation2 + $0x588] sm:$0xff]
    %v247 = vld [vmem:[#allocation2 + $0x590] sm:$0xff]
    %v248 = vld [vmem:[#allocation2 + $0x598] sm:$0xff]
    %v249 = vld [vmem:[#allocation2 + $0x5a0] sm:$0xff]
    %v250 = vld [vmem:[#allocation2 + $0x5a8] sm:$0xff]
    %v251 = vld [vmem:[#allocation2 + $0x5b0] sm:$0xff]
    %v252 = vld [vmem:[#allocation2 + $0x5b8] sm:$0xff]
    %v253 = vld [vmem:[#allocation2 + $0x5c0] sm:$0xff]
    %v254 = vld [vmem:[#allocation2 + $0x5c8] sm:$0xff]
    %v255 = vld [vmem:[#allocation2 + $0x5d0] sm:$0xff]
    %v256 = vld [vmem:[#allocation2 + $0x5d8] sm:$0xff]
    %v257 = vld [vmem:[#allocation2 + $0x5e0] sm:$0xff]
    %v258 = vld [vmem:[#allocation2 + $0x5e8] sm:$0xff]
    %v259 = vld [vmem:[#allocation2 + $0x5f0] sm:$0xff]
    %v260 = vld [vmem:[#allocation2 + $0x5f8] sm:$0xff]
    %v261 = vld [vmem:[%s2] sm:$0xf]
    %v263 = vlaneseq
    %v264 = vshrl.u32 %v263, 7
    %v265 = vsub.s32 0, %v264
    %v266 = vrot.slane %v261, %v265
    %v267 = vlaneseq
    %v268 = vshrl.u32 %v267, 7
    %v269 = vsub.s32 1, %v268
    %v270 = vrot.slane %v261, %v269
    %v271 = vlaneseq
    %v272 = vshrl.u32 %v271, 7
    %v273 = vsub.s32 2, %v272
    %v274 = vrot.slane %v261, %v273
    %v275 = vlaneseq
    %v276 = vshrl.u32 %v275, 7
    %v277 = vsub.s32 3, %v276
    %v278 = vrot.slane %v261, %v277
    %v284 = vcombine.high %v68, %v68
    %v286 = vunpack.c.l.s4 1966171168
    %v287 = vunpack.c.0.s8 %v286
    %v288 = vlaneseq
    %v289 = vshrl.u32 %v288, 7
    %v290 = vsub.s32 %v287, %v289
    %v291 = vrot.slane %v68, %v290
    %v293 = vunpack.c.l.s4 1966171168
    %v294 = vunpack.c.0.s8 %v293
    %v295 = vlaneseq
    %v296 = vshrl.u32 %v295, 7
    %v297 = vsub.s32 %v294, %v296
    %v298 = vrot.slane %v284, %v297
    %v299 = vcombine.high %v291, %v291
    %v300 = vcombine.high %v298, %v298
    %v302 = vunpack.c.l.s4 1966171168
    %v303 = vunpack.c.0.s8 %v302
    %v304 = vlaneseq
    %v305 = vshrl.u32 %v304, 7
    %v306 = vsub.s32 %v303, %v305
    %v307 = vrot.slane %v291, %v306
    %v309 = vunpack.c.l.s4 1966171168
    %v310 = vunpack.c.0.s8 %v309
    %v311 = vlaneseq
    %v312 = vshrl.u32 %v311, 7
    %v313 = vsub.s32 %v310, %v312
    %v314 = vrot.slane %v298, %v313
    %v316 = vunpack.c.l.s4 1966171168
    %v317 = vunpack.c.0.s8 %v316
    %v318 = vlaneseq
    %v319 = vshrl.u32 %v318, 7
    %v320 = vsub.s32 %v317, %v319
    %v321 = vrot.slane %v299, %v320
    %v323 = vunpack.c.l.s4 1966171168
    %v324 = vunpack.c.0.s8 %v323
    %v325 = vlaneseq
    %v326 = vshrl.u32 %v325, 7
    %v327 = vsub.s32 %v324, %v326
    %v328 = vrot.slane %v300, %v327
    %v329 = vcombine.high %v307, %v307
    %v330 = vcombine.high %v321, %v321
    %v529 = vunpack.c.l.b16 %v69
    %v530 = vunpack.c.h.b16 %v69
    %v531 = vunpack.c.l.b16 %v70
    %v532 = vunpack.c.h.b16 %v70
    %v533 = vunpack.c.l.b16 %v71
    %v534 = vunpack.c.h.b16 %v71
    %v535 = vunpack.c.l.b16 %v72
    %v536 = vunpack.c.h.b16 %v72
    %v537 = vunpack.c.l.b16 %v73
    %v538 = vunpack.c.h.b16 %v73
    %v539 = vunpack.c.l.b16 %v74
    %v540 = vunpack.c.h.b16 %v74
    %v541 = vunpack.c.l.b16 %v75
    %v542 = vunpack.c.h.b16 %v75
    %v543 = vunpack.c.l.b16 %v76
    %v544 = vunpack.c.h.b16 %v76
    %v545 = vunpack.c.l.b16 %v77
    %v546 = vunpack.c.h.b16 %v77
    %v547 = vunpack.c.l.b16 %v78
    %v548 = vunpack.c.h.b16 %v78
    %v549 = vunpack.c.l.b16 %v79
    %v550 = vunpack.c.h.b16 %v79
    %v551 = vunpack.c.l.b16 %v80
    %v552 = vunpack.c.h.b16 %v80
    %v553 = vunpack.c.l.b16 %v81
    %v554 = vunpack.c.h.b16 %v81
    %v555 = vunpack.c.l.b16 %v82
    %v556 = vunpack.c.h.b16 %v82
    %v557 = vunpack.c.l.b16 %v83
    %v558 = vunpack.c.h.b16 %v83
    %v559 = vunpack.c.l.b16 %v84
    %v560 = vunpack.c.h.b16 %v84
    %v561 = vunpack.c.l.b16 %v85
    %v562 = vunpack.c.h.b16 %v85
    %v563 = vunpack.c.l.b16 %v86
    %v564 = vunpack.c.h.b16 %v86
    %v565 = vunpack.c.l.b16 %v87
    %v566 = vunpack.c.h.b16 %v87
    %v567 = vunpack.c.l.b16 %v88
    %v568 = vunpack.c.h.b16 %v88
    %v569 = vunpack.c.l.b16 %v89
    %v570 = vunpack.c.h.b16 %v89
    %v571 = vunpack.c.l.b16 %v90
    %v572 = vunpack.c.h.b16 %v90
    %v573 = vunpack.c.l.b16 %v91
    %v574 = vunpack.c.h.b16 %v91
    %v575 = vunpack.c.l.b16 %v92
    %v576 = vunpack.c.h.b16 %v92
    %v577 = vunpack.c.l.b16 %v93
    %v578 = vunpack.c.h.b16 %v93
    %v579 = vunpack.c.l.b16 %v94
    %v580 = vunpack.c.h.b16 %v94
    %v581 = vunpack.c.l.b16 %v95
    %v582 = vunpack.c.h.b16 %v95
    %v583 = vunpack.c.l.b16 %v96
    %v584 = vunpack.c.h.b16 %v96
    %v585 = vunpack.c.l.b16 %v97
    %v586 = vunpack.c.h.b16 %v97
    %v587 = vunpack.c.l.b16 %v98
    %v588 = vunpack.c.h.b16 %v98
    %v589 = vunpack.c.l.b16 %v99
    %v590 = vunpack.c.h.b16 %v99
    %v591 = vunpack.c.l.b16 %v100
    %v592 = vunpack.c.h.b16 %v100
    %v593 = vunpack.c.l.b16 %v101
    %v594 = vunpack.c.h.b16 %v101
    %v595 = vunpack.c.l.b16 %v102
    %v596 = vunpack.c.h.b16 %v102
    %v597 = vunpack.c.l.b16 %v103
    %v598 = vunpack.c.h.b16 %v103
    %v599 = vunpack.c.l.b16 %v104
    %v600 = vunpack.c.h.b16 %v104
    %v601 = vunpack.c.l.b16 %v105
    %v602 = vunpack.c.h.b16 %v105
    %v603 = vunpack.c.l.b16 %v106
    %v604 = vunpack.c.h.b16 %v106
    %v605 = vunpack.c.l.b16 %v107
    %v606 = vunpack.c.h.b16 %v107
    %v607 = vunpack.c.l.b16 %v108
    %v608 = vunpack.c.h.b16 %v108
    %v609 = vunpack.c.l.b16 %v109
    %v610 = vunpack.c.h.b16 %v109
    %v611 = vunpack.c.l.b16 %v110
    %v612 = vunpack.c.h.b16 %v110
    %v613 = vunpack.c.l.b16 %v111
    %v614 = vunpack.c.h.b16 %v111
    %v615 = vunpack.c.l.b16 %v112
    %v616 = vunpack.c.h.b16 %v112
    %v617 = vunpack.c.l.b16 %v113
    %v618 = vunpack.c.h.b16 %v113
    %v619 = vunpack.c.l.b16 %v114
    %v620 = vunpack.c.h.b16 %v114
    %v621 = vunpack.c.l.b16 %v115
    %v622 = vunpack.c.h.b16 %v115
    %v623 = vunpack.c.l.b16 %v116
    %v624 = vunpack.c.h.b16 %v116
    %v625 = vunpack.c.l.b16 %v117
    %v626 = vunpack.c.h.b16 %v117
    %v627 = vunpack.c.l.b16 %v118
    %v628 = vunpack.c.h.b16 %v118
    %v629 = vunpack.c.l.b16 %v119
    %v630 = vunpack.c.h.b16 %v119
    %v631 = vunpack.c.l.b16 %v120
    %v632 = vunpack.c.h.b16 %v120
    %v633 = vunpack.c.l.b16 %v121
    %v634 = vunpack.c.h.b16 %v121
    %v635 = vunpack.c.l.b16 %v122
    %v636 = vunpack.c.h.b16 %v122
    %v637 = vunpack.c.l.b16 %v123
    %v638 = vunpack.c.h.b16 %v123
    %v639 = vunpack.c.l.b16 %v124
    %v640 = vunpack.c.h.b16 %v124
    %v641 = vunpack.c.l.b16 %v125
    %v642 = vunpack.c.h.b16 %v125
    %v643 = vunpack.c.l.b16 %v126
    %v644 = vunpack.c.h.b16 %v126
    %v645 = vunpack.c.l.b16 %v127
    %v646 = vunpack.c.h.b16 %v127
    %v647 = vunpack.c.l.b16 %v128
    %v648 = vunpack.c.h.b16 %v128
    %v649 = vunpack.c.l.b16 %v129
    %v650 = vunpack.c.h.b16 %v129
    %v651 = vunpack.c.l.b16 %v130
    %v652 = vunpack.c.h.b16 %v130
    %v653 = vunpack.c.l.b16 %v131
    %v654 = vunpack.c.h.b16 %v131
    %v655 = vunpack.c.l.b16 %v132
    %v656 = vunpack.c.h.b16 %v132
    %v657 = vunpack.c.l.b16 %v133
    %v658 = vunpack.c.h.b16 %v133
    %v659 = vunpack.c.l.b16 %v134
    %v660 = vunpack.c.h.b16 %v134
    %v661 = vunpack.c.l.b16 %v135
    %v662 = vunpack.c.h.b16 %v135
    %v663 = vunpack.c.l.b16 %v136
    %v664 = vunpack.c.h.b16 %v136
    %v665 = vunpack.c.l.b16 %v137
    %v666 = vunpack.c.h.b16 %v137
    %v667 = vunpack.c.l.b16 %v138
    %v668 = vunpack.c.h.b16 %v138
    %v669 = vunpack.c.l.b16 %v139
    %v670 = vunpack.c.h.b16 %v139
    %v671 = vunpack.c.l.b16 %v140
    %v672 = vunpack.c.h.b16 %v140
    %v673 = vunpack.c.l.b16 %v141
    %v674 = vunpack.c.h.b16 %v141
    %v675 = vunpack.c.l.b16 %v142
    %v676 = vunpack.c.h.b16 %v142
    %v677 = vunpack.c.l.b16 %v143
    %v678 = vunpack.c.h.b16 %v143
    %v679 = vunpack.c.l.b16 %v144
    %v680 = vunpack.c.h.b16 %v144
    %v681 = vunpack.c.l.b16 %v145
    %v682 = vunpack.c.h.b16 %v145
    %v683 = vunpack.c.l.b16 %v146
    %v684 = vunpack.c.h.b16 %v146
    %v685 = vunpack.c.l.b16 %v147
    %v686 = vunpack.c.h.b16 %v147
    %v687 = vunpack.c.l.b16 %v148
    %v688 = vunpack.c.h.b16 %v148
    %v689 = vunpack.c.l.b16 %v149
    %v690 = vunpack.c.h.b16 %v149
    %v691 = vunpack.c.l.b16 %v150
    %v692 = vunpack.c.h.b16 %v150
    %v693 = vunpack.c.l.b16 %v151
    %v694 = vunpack.c.h.b16 %v151
    %v695 = vunpack.c.l.b16 %v152
    %v696 = vunpack.c.h.b16 %v152
    %v697 = vunpack.c.l.b16 %v153
    %v698 = vunpack.c.h.b16 %v153
    %v699 = vunpack.c.l.b16 %v154
    %v700 = vunpack.c.h.b16 %v154
    %v701 = vunpack.c.l.b16 %v155
    %v702 = vunpack.c.h.b16 %v155
    %v703 = vunpack.c.l.b16 %v156
    %v704 = vunpack.c.h.b16 %v156
    %v705 = vunpack.c.l.b16 %v157
    %v706 = vunpack.c.h.b16 %v157
    %v707 = vunpack.c.l.b16 %v158
    %v708 = vunpack.c.h.b16 %v158
    %v709 = vunpack.c.l.b16 %v159
    %v710 = vunpack.c.h.b16 %v159
    %v711 = vunpack.c.l.b16 %v160
    %v712 = vunpack.c.h.b16 %v160
    %v713 = vunpack.c.l.b16 %v161
    %v714 = vunpack.c.h.b16 %v161
    %v715 = vunpack.c.l.b16 %v162
    %v716 = vunpack.c.h.b16 %v162
    %v717 = vunpack.c.l.b16 %v163
    %v718 = vunpack.c.h.b16 %v163
    %v719 = vunpack.c.l.b16 %v164
    %v720 = vunpack.c.h.b16 %v164
    %v721 = vunpack.c.l.b16 %v165
    %v722 = vunpack.c.h.b16 %v165
    %v723 = vunpack.c.l.b16 %v166
    %v724 = vunpack.c.h.b16 %v166
    %v725 = vunpack.c.l.b16 %v167
    %v726 = vunpack.c.h.b16 %v167
    %v727 = vunpack.c.l.b16 %v168
    %v728 = vunpack.c.h.b16 %v168
    %v729 = vunpack.c.l.b16 %v169
    %v730 = vunpack.c.h.b16 %v169
    %v731 = vunpack.c.l.b16 %v170
    %v732 = vunpack.c.h.b16 %v170
    %v733 = vunpack.c.l.b16 %v171
    %v734 = vunpack.c.h.b16 %v171
    %v735 = vunpack.c.l.b16 %v172
    %v736 = vunpack.c.h.b16 %v172
    %v737 = vunpack.c.l.b16 %v173
    %v738 = vunpack.c.h.b16 %v173
    %v739 = vunpack.c.l.b16 %v174
    %v740 = vunpack.c.h.b16 %v174
    %v741 = vunpack.c.l.b16 %v175
    %v742 = vunpack.c.h.b16 %v175
    %v743 = vunpack.c.l.b16 %v176
    %v744 = vunpack.c.h.b16 %v176
    %v745 = vunpack.c.l.b16 %v177
    %v746 = vunpack.c.h.b16 %v177
    %v747 = vunpack.c.l.b16 %v178
    %v748 = vunpack.c.h.b16 %v178
    %v749 = vunpack.c.l.b16 %v179
    %v750 = vunpack.c.h.b16 %v179
    %v751 = vunpack.c.l.b16 %v180
    %v752 = vunpack.c.h.b16 %v180
    %v753 = vunpack.c.l.b16 %v181
    %v754 = vunpack.c.h.b16 %v181
    %v755 = vunpack.c.l.b16 %v182
    %v756 = vunpack.c.h.b16 %v182
    %v757 = vunpack.c.l.b16 %v183
    %v758 = vunpack.c.h.b16 %v183
    %v759 = vunpack.c.l.b16 %v184
    %v760 = vunpack.c.h.b16 %v184
    %v761 = vunpack.c.l.b16 %v185
    %v762 = vunpack.c.h.b16 %v185
    %v763 = vunpack.c.l.b16 %v186
    %v764 = vunpack.c.h.b16 %v186
    %v765 = vunpack.c.l.b16 %v187
    %v766 = vunpack.c.h.b16 %v187
    %v767 = vunpack.c.l.b16 %v188
    %v768 = vunpack.c.h.b16 %v188
    %v769 = vunpack.c.l.b16 %v189
    %v770 = vunpack.c.h.b16 %v189
    %v771 = vunpack.c.l.b16 %v190
    %v772 = vunpack.c.h.b16 %v190
    %v773 = vunpack.c.l.b16 %v191
    %v774 = vunpack.c.h.b16 %v191
    %v775 = vunpack.c.l.b16 %v192
    %v776 = vunpack.c.h.b16 %v192
    %v777 = vunpack.c.l.b16 %v193
    %v778 = vunpack.c.h.b16 %v193
    %v779 = vunpack.c.l.b16 %v194
    %v780 = vunpack.c.h.b16 %v194
    %v781 = vunpack.c.l.b16 %v195
    %v782 = vunpack.c.h.b16 %v195
    %v783 = vunpack.c.l.b16 %v196
    %v784 = vunpack.c.h.b16 %v196
    %v785 = vunpack.c.l.b16 %v197
    %v786 = vunpack.c.h.b16 %v197
    %v787 = vunpack.c.l.b16 %v198
    %v788 = vunpack.c.h.b16 %v198
    %v789 = vunpack.c.l.b16 %v199
    %v790 = vunpack.c.h.b16 %v199
    %v791 = vunpack.c.l.b16 %v200
    %v792 = vunpack.c.h.b16 %v200
    %v793 = vunpack.c.l.b16 %v201
    %v794 = vunpack.c.h.b16 %v201
    %v795 = vunpack.c.l.b16 %v202
    %v796 = vunpack.c.h.b16 %v202
    %v797 = vunpack.c.l.b16 %v203
    %v798 = vunpack.c.h.b16 %v203
    %v799 = vunpack.c.l.b16 %v204
    %v800 = vunpack.c.h.b16 %v204
    %v801 = vunpack.c.l.b16 %v205
    %v802 = vunpack.c.h.b16 %v205
    %v803 = vunpack.c.l.b16 %v206
    %v804 = vunpack.c.h.b16 %v206
    %v805 = vunpack.c.l.b16 %v207
    %v806 = vunpack.c.h.b16 %v207
    %v807 = vunpack.c.l.b16 %v208
    %v808 = vunpack.c.h.b16 %v208
    %v809 = vunpack.c.l.b16 %v209
    %v810 = vunpack.c.h.b16 %v209
    %v811 = vunpack.c.l.b16 %v210
    %v812 = vunpack.c.h.b16 %v210
    %v813 = vunpack.c.l.b16 %v211
    %v814 = vunpack.c.h.b16 %v211
    %v815 = vunpack.c.l.b16 %v212
    %v816 = vunpack.c.h.b16 %v212
    %v817 = vunpack.c.l.b16 %v213
    %v818 = vunpack.c.h.b16 %v213
    %v819 = vunpack.c.l.b16 %v214
    %v820 = vunpack.c.h.b16 %v214
    %v821 = vunpack.c.l.b16 %v215
    %v822 = vunpack.c.h.b16 %v215
    %v823 = vunpack.c.l.b16 %v216
    %v824 = vunpack.c.h.b16 %v216
    %v825 = vunpack.c.l.b16 %v217
    %v826 = vunpack.c.h.b16 %v217
    %v827 = vunpack.c.l.b16 %v218
    %v828 = vunpack.c.h.b16 %v218
    %v829 = vunpack.c.l.b16 %v219
    %v830 = vunpack.c.h.b16 %v219
    %v831 = vunpack.c.l.b16 %v220
    %v832 = vunpack.c.h.b16 %v220
    %v833 = vunpack.c.l.b16 %v221
    %v834 = vunpack.c.h.b16 %v221
    %v835 = vunpack.c.l.b16 %v222
    %v836 = vunpack.c.h.b16 %v222
    %v837 = vunpack.c.l.b16 %v223
    %v838 = vunpack.c.h.b16 %v223
    %v839 = vunpack.c.l.b16 %v224
    %v840 = vunpack.c.h.b16 %v224
    %v841 = vunpack.c.l.b16 %v225
    %v842 = vunpack.c.h.b16 %v225
    %v843 = vunpack.c.l.b16 %v226
    %v844 = vunpack.c.h.b16 %v226
    %v845 = vunpack.c.l.b16 %v227
    %v846 = vunpack.c.h.b16 %v227
    %v847 = vunpack.c.l.b16 %v228
    %v848 = vunpack.c.h.b16 %v228
    %v849 = vunpack.c.l.b16 %v229
    %v850 = vunpack.c.h.b16 %v229
    %v851 = vunpack.c.l.b16 %v230
    %v852 = vunpack.c.h.b16 %v230
    %v853 = vunpack.c.l.b16 %v231
    %v854 = vunpack.c.h.b16 %v231
    %v855 = vunpack.c.l.b16 %v232
    %v856 = vunpack.c.h.b16 %v232
    %v857 = vunpack.c.l.b16 %v233
    %v858 = vunpack.c.h.b16 %v233
    %v859 = vunpack.c.l.b16 %v234
    %v860 = vunpack.c.h.b16 %v234
    %v861 = vunpack.c.l.b16 %v235
    %v862 = vunpack.c.h.b16 %v235
    %v863 = vunpack.c.l.b16 %v236
    %v864 = vunpack.c.h.b16 %v236
    %v865 = vunpack.c.l.b16 %v237
    %v866 = vunpack.c.h.b16 %v237
    %v867 = vunpack.c.l.b16 %v238
    %v868 = vunpack.c.h.b16 %v238
    %v869 = vunpack.c.l.b16 %v239
    %v870 = vunpack.c.h.b16 %v239
    %v871 = vunpack.c.l.b16 %v240
    %v872 = vunpack.c.h.b16 %v240
    %v873 = vunpack.c.l.b16 %v241
    %v874 = vunpack.c.h.b16 %v241
    %v875 = vunpack.c.l.b16 %v242
    %v876 = vunpack.c.h.b16 %v242
    %v877 = vunpack.c.l.b16 %v243
    %v878 = vunpack.c.h.b16 %v243
    %v879 = vunpack.c.l.b16 %v244
    %v880 = vunpack.c.h.b16 %v244
    %v881 = vunpack.c.l.b16 %v245
    %v882 = vunpack.c.h.b16 %v245
    %v883 = vunpack.c.l.b16 %v246
    %v884 = vunpack.c.h.b16 %v246
    %v885 = vunpack.c.l.b16 %v247
    %v886 = vunpack.c.h.b16 %v247
    %v887 = vunpack.c.l.b16 %v248
    %v888 = vunpack.c.h.b16 %v248
    %v889 = vunpack.c.l.b16 %v249
    %v890 = vunpack.c.h.b16 %v249
    %v891 = vunpack.c.l.b16 %v250
    %v892 = vunpack.c.h.b16 %v250
    %v893 = vunpack.c.l.b16 %v251
    %v894 = vunpack.c.h.b16 %v251
    %v895 = vunpack.c.l.b16 %v252
    %v896 = vunpack.c.h.b16 %v252
    %v897 = vunpack.c.l.b16 %v253
    %v898 = vunpack.c.h.b16 %v253
    %v899 = vunpack.c.l.b16 %v254
    %v900 = vunpack.c.h.b16 %v254
    %v901 = vunpack.c.l.b16 %v255
    %v902 = vunpack.c.h.b16 %v255
    %v903 = vunpack.c.l.b16 %v256
    %v904 = vunpack.c.h.b16 %v256
    %v905 = vunpack.c.l.b16 %v257
    %v906 = vunpack.c.h.b16 %v257
    %v907 = vunpack.c.l.b16 %v258
    %v908 = vunpack.c.h.b16 %v258
    %v909 = vunpack.c.l.b16 %v259
    %v910 = vunpack.c.h.b16 %v259
    %v911 = vunpack.c.l.b16 %v260
    %v912 = vunpack.c.h.b16 %v260
    %v913 = vpack.c.b16 %v533, %v529
    %v914 = vpack.c.b16 %v534, %v530
    %v915 = vpack.c.b16 %v535, %v531
    %v916 = vpack.c.b16 %v536, %v532
    %v917 = vpack.c.b16 %v541, %v537
    %v918 = vpack.c.b16 %v542, %v538
    %v919 = vpack.c.b16 %v543, %v539
    %v920 = vpack.c.b16 %v544, %v540
    %v921 = vpack.c.b16 %v549, %v545
    %v922 = vpack.c.b16 %v550, %v546
    %v923 = vpack.c.b16 %v551, %v547
    %v924 = vpack.c.b16 %v552, %v548
    %v925 = vpack.c.b16 %v557, %v553
    %v926 = vpack.c.b16 %v558, %v554
    %v927 = vpack.c.b16 %v559, %v555
    %v928 = vpack.c.b16 %v560, %v556
    %v929 = vpack.c.b16 %v565, %v561
    %v930 = vpack.c.b16 %v566, %v562
    %v931 = vpack.c.b16 %v567, %v563
    %v932 = vpack.c.b16 %v568, %v564
    %v933 = vpack.c.b16 %v573, %v569
    %v934 = vpack.c.b16 %v574, %v570
    %v935 = vpack.c.b16 %v575, %v571
    %v936 = vpack.c.b16 %v576, %v572
    %v937 = vpack.c.b16 %v581, %v577
    %v938 = vpack.c.b16 %v582, %v578
    %v939 = vpack.c.b16 %v583, %v579
    %v940 = vpack.c.b16 %v584, %v580
    %v941 = vpack.c.b16 %v589, %v585
    %v942 = vpack.c.b16 %v590, %v586
    %v943 = vpack.c.b16 %v591, %v587
    %v944 = vpack.c.b16 %v592, %v588
    %v945 = vpack.c.b16 %v597, %v593
    %v946 = vpack.c.b16 %v598, %v594
    %v947 = vpack.c.b16 %v599, %v595
    %v948 = vpack.c.b16 %v600, %v596
    %v949 = vpack.c.b16 %v605, %v601
    %v950 = vpack.c.b16 %v606, %v602
    %v951 = vpack.c.b16 %v607, %v603
    %v952 = vpack.c.b16 %v608, %v604
    %v953 = vpack.c.b16 %v613, %v609
    %v954 = vpack.c.b16 %v614, %v610
    %v955 = vpack.c.b16 %v615, %v611
    %v956 = vpack.c.b16 %v616, %v612
    %v957 = vpack.c.b16 %v621, %v617
    %v958 = vpack.c.b16 %v622, %v618
    %v959 = vpack.c.b16 %v623, %v619
    %v960 = vpack.c.b16 %v624, %v620
    %v961 = vpack.c.b16 %v629, %v625
    %v962 = vpack.c.b16 %v630, %v626
    %v963 = vpack.c.b16 %v631, %v627
    %v964 = vpack.c.b16 %v632, %v628
    %v965 = vpack.c.b16 %v637, %v633
    %v966 = vpack.c.b16 %v638, %v634
    %v967 = vpack.c.b16 %v639, %v635
    %v968 = vpack.c.b16 %v640, %v636
    %v969 = vpack.c.b16 %v645, %v641
    %v970 = vpack.c.b16 %v646, %v642
    %v971 = vpack.c.b16 %v647, %v643
    %v972 = vpack.c.b16 %v648, %v644
    %v973 = vpack.c.b16 %v653, %v649
    %v974 = vpack.c.b16 %v654, %v650
    %v975 = vpack.c.b16 %v655, %v651
    %v976 = vpack.c.b16 %v656, %v652
    %v977 = vpack.c.b16 %v661, %v657
    %v978 = vpack.c.b16 %v662, %v658
    %v979 = vpack.c.b16 %v663, %v659
    %v980 = vpack.c.b16 %v664, %v660
    %v981 = vpack.c.b16 %v669, %v665
    %v982 = vpack.c.b16 %v670, %v666
    %v983 = vpack.c.b16 %v671, %v667
    %v984 = vpack.c.b16 %v672, %v668
    %v985 = vpack.c.b16 %v677, %v673
    %v986 = vpack.c.b16 %v678, %v674
    %v987 = vpack.c.b16 %v679, %v675
    %v988 = vpack.c.b16 %v680, %v676
    %v989 = vpack.c.b16 %v685, %v681
    %v990 = vpack.c.b16 %v686, %v682
    %v991 = vpack.c.b16 %v687, %v683
    %v992 = vpack.c.b16 %v688, %v684
    %v993 = vpack.c.b16 %v693, %v689
    %v994 = vpack.c.b16 %v694, %v690
    %v995 = vpack.c.b16 %v695, %v691
    %v996 = vpack.c.b16 %v696, %v692
    %v997 = vpack.c.b16 %v701, %v697
    %v998 = vpack.c.b16 %v702, %v698
    %v999 = vpack.c.b16 %v703, %v699
    %v1000 = vpack.c.b16 %v704, %v700
    %v1001 = vpack.c.b16 %v709, %v705
    %v1002 = vpack.c.b16 %v710, %v706
    %v1003 = vpack.c.b16 %v711, %v707
    %v1004 = vpack.c.b16 %v712, %v708
    %v1005 = vpack.c.b16 %v717, %v713
    %v1006 = vpack.c.b16 %v718, %v714
    %v1007 = vpack.c.b16 %v719, %v715
    %v1008 = vpack.c.b16 %v720, %v716
    %v1009 = vpack.c.b16 %v725, %v721
    %v1010 = vpack.c.b16 %v726, %v722
    %v1011 = vpack.c.b16 %v727, %v723
    %v1012 = vpack.c.b16 %v728, %v724
    %v1013 = vpack.c.b16 %v733, %v729
    %v1014 = vpack.c.b16 %v734, %v730
    %v1015 = vpack.c.b16 %v735, %v731
    %v1016 = vpack.c.b16 %v736, %v732
    %v1017 = vpack.c.b16 %v741, %v737
    %v1018 = vpack.c.b16 %v742, %v738
    %v1019 = vpack.c.b16 %v743, %v739
    %v1020 = vpack.c.b16 %v744, %v740
    %v1021 = vpack.c.b16 %v749, %v745
    %v1022 = vpack.c.b16 %v750, %v746
    %v1023 = vpack.c.b16 %v751, %v747
    %v1024 = vpack.c.b16 %v752, %v748
    %v1025 = vpack.c.b16 %v757, %v753
    %v1026 = vpack.c.b16 %v758, %v754
    %v1027 = vpack.c.b16 %v759, %v755
    %v1028 = vpack.c.b16 %v760, %v756
    %v1029 = vpack.c.b16 %v765, %v761
    %v1030 = vpack.c.b16 %v766, %v762
    %v1031 = vpack.c.b16 %v767, %v763
    %v1032 = vpack.c.b16 %v768, %v764
    %v1033 = vpack.c.b16 %v773, %v769
    %v1034 = vpack.c.b16 %v774, %v770
    %v1035 = vpack.c.b16 %v775, %v771
    %v1036 = vpack.c.b16 %v776, %v772
    %v1037 = vpack.c.b16 %v781, %v777
    %v1038 = vpack.c.b16 %v782, %v778
    %v1039 = vpack.c.b16 %v783, %v779
    %v1040 = vpack.c.b16 %v784, %v780
    %v1041 = vpack.c.b16 %v789, %v785
    %v1042 = vpack.c.b16 %v790, %v786
    %v1043 = vpack.c.b16 %v791, %v787
    %v1044 = vpack.c.b16 %v792, %v788
    %v1045 = vpack.c.b16 %v797, %v793
    %v1046 = vpack.c.b16 %v798, %v794
    %v1047 = vpack.c.b16 %v799, %v795
    %v1048 = vpack.c.b16 %v800, %v796
    %v1049 = vpack.c.b16 %v805, %v801
    %v1050 = vpack.c.b16 %v806, %v802
    %v1051 = vpack.c.b16 %v807, %v803
    %v1052 = vpack.c.b16 %v808, %v804
    %v1053 = vpack.c.b16 %v813, %v809
    %v1054 = vpack.c.b16 %v814, %v810
    %v1055 = vpack.c.b16 %v815, %v811
    %v1056 = vpack.c.b16 %v816, %v812
    %v1057 = vpack.c.b16 %v821, %v817
    %v1058 = vpack.c.b16 %v822, %v818
    %v1059 = vpack.c.b16 %v823, %v819
    %v1060 = vpack.c.b16 %v824, %v820
    %v1061 = vpack.c.b16 %v829, %v825
    %v1062 = vpack.c.b16 %v830, %v826
    %v1063 = vpack.c.b16 %v831, %v827
    %v1064 = vpack.c.b16 %v832, %v828
    %v1065 = vpack.c.b16 %v837, %v833
    %v1066 = vpack.c.b16 %v838, %v834
    %v1067 = vpack.c.b16 %v839, %v835
    %v1068 = vpack.c.b16 %v840, %v836
    %v1069 = vpack.c.b16 %v845, %v841
    %v1070 = vpack.c.b16 %v846, %v842
    %v1071 = vpack.c.b16 %v847, %v843
    %v1072 = vpack.c.b16 %v848, %v844
    %v1073 = vpack.c.b16 %v853, %v849
    %v1074 = vpack.c.b16 %v854, %v850
    %v1075 = vpack.c.b16 %v855, %v851
    %v1076 = vpack.c.b16 %v856, %v852
    %v1077 = vpack.c.b16 %v861, %v857
    %v1078 = vpack.c.b16 %v862, %v858
    %v1079 = vpack.c.b16 %v863, %v859
    %v1080 = vpack.c.b16 %v864, %v860
    %v1081 = vpack.c.b16 %v869, %v865
    %v1082 = vpack.c.b16 %v870, %v866
    %v1083 = vpack.c.b16 %v871, %v867
    %v1084 = vpack.c.b16 %v872, %v868
    %v1085 = vpack.c.b16 %v877, %v873
    %v1086 = vpack.c.b16 %v878, %v874
    %v1087 = vpack.c.b16 %v879, %v875
    %v1088 = vpack.c.b16 %v880, %v876
    %v1089 = vpack.c.b16 %v885, %v881
    %v1090 = vpack.c.b16 %v886, %v882
    %v1091 = vpack.c.b16 %v887, %v883
    %v1092 = vpack.c.b16 %v888, %v884
    %v1093 = vpack.c.b16 %v893, %v889
    %v1094 = vpack.c.b16 %v894, %v890
    %v1095 = vpack.c.b16 %v895, %v891
    %v1096 = vpack.c.b16 %v896, %v892
    %v1097 = vpack.c.b16 %v901, %v897
    %v1098 = vpack.c.b16 %v902, %v898
    %v1099 = vpack.c.b16 %v903, %v899
    %v1100 = vpack.c.b16 %v904, %v900
    %v1101 = vpack.c.b16 %v909, %v905
    %v1102 = vpack.c.b16 %v910, %v906
    %v1103 = vpack.c.b16 %v911, %v907
    %v1104 = vpack.c.b16 %v912, %v908
    %1297 = vmatprep.subr.bf16.mxu0 %v914
    %1298 = vmatpush1.bf16.msra.mxu0 %v913
    %1299 = vmatprep.subr.bf16.mxu0 %v918
    %1300 = vmatpush1.bf16.msra.mxu0 %v917
    %1301 = vmatprep.subr.bf16.mxu0 %v922
    %1302 = vmatpush1.bf16.msra.mxu0 %v921
    %1303 = vmatprep.subr.bf16.mxu0 %v926
    %1304 = vmatpush1.bf16.msra.mxu0 %v925
    %1305 = vmatprep.subr.bf16.mxu0 %v930
    %1306 = vmatpush1.bf16.msra.mxu0 %v929
    %1307 = vmatprep.subr.bf16.mxu0 %v934
    %1308 = vmatpush1.bf16.msra.mxu0 %v933
    %1309 = vmatprep.subr.bf16.mxu0 %v938
    %1310 = vmatpush1.bf16.msra.mxu0 %v937
    %1311 = vmatprep.subr.bf16.mxu0 %v942
    %1312 = vmatpush1.bf16.msra.mxu0 %v941
    %1313 = vmatprep.subr.bf16.mxu0 %v946
    %1314 = vmatpush1.bf16.msra.mxu0 %v945
    %1315 = vmatprep.subr.bf16.mxu0 %v950
    %1316 = vmatpush1.bf16.msra.mxu0 %v949
    %1317 = vmatprep.subr.bf16.mxu0 %v954
    %1318 = vmatpush1.bf16.msra.mxu0 %v953
    %1319 = vmatprep.subr.bf16.mxu0 %v958
    %1320 = vmatpush1.bf16.msra.mxu0 %v957
    %1321 = vmatprep.subr.bf16.mxu0 %v962
    %1322 = vmatpush1.bf16.msra.mxu0 %v961
    %1323 = vmatprep.subr.bf16.mxu0 %v966
    %1324 = vmatpush1.bf16.msra.mxu0 %v965
    %1325 = vmatprep.subr.bf16.mxu0 %v970
    %1326 = vmatpush1.bf16.msra.mxu0 %v969
    %1327 = vmatprep.subr.bf16.mxu0 %v974
    %1328 = vmatpush1.bf16.msra.mxu0 %v973
    %1329 = vmatprep.mubr.bf16.mxu0 %v321
    %1330 = vmatmul.mubr.bf16.gmra.mrb[0].mxu0 %v307
    %v1331 = vpop.f32.mrb[0].mxu0
    %v1332 = vadd.f32 %v266, %v1331
    %v1333 = vpop.f32.mrb[0].mxu0
    %v1334 = vadd.f32 %v270, %v1333
    %v1335 = vpop.f32.mrb[0].mxu0
    %v1336 = vpop.f32.mrb[0].mxu0
    %1337 = vdwg.mxu0
    %1338 = vmatprep.subr.bf16.mxu0 %v978
    %1339 = vmatpush1.bf16.msra.mxu0 %v977
    %1340 = vmatprep.subr.bf16.mxu0 %v982
    %1341 = vmatpush1.bf16.msra.mxu0 %v981
    %1342 = vmatprep.subr.bf16.mxu0 %v986
    %1343 = vmatpush1.bf16.msra.mxu0 %v985
    %1344 = vmatprep.subr.bf16.mxu0 %v990
    %1345 = vmatpush1.bf16.msra.mxu0 %v989
    %1346 = vmatprep.subr.bf16.mxu0 %v994
    %1347 = vmatpush1.bf16.msra.mxu0 %v993
    %1348 = vmatprep.subr.bf16.mxu0 %v998
    %1349 = vmatpush1.bf16.msra.mxu0 %v997
    %1350 = vmatprep.subr.bf16.mxu0 %v1002
    %1351 = vmatpush1.bf16.msra.mxu0 %v1001
    %1352 = vmatprep.subr.bf16.mxu0 %v1006
    %1353 = vmatpush1.bf16.msra.mxu0 %v1005
    %1354 = vmatprep.subr.bf16.mxu0 %v1010
    %1355 = vmatpush1.bf16.msra.mxu0 %v1009
    %1356 = vmatprep.subr.bf16.mxu0 %v1014
    %1357 = vmatpush1.bf16.msra.mxu0 %v1013
    %1358 = vmatprep.subr.bf16.mxu0 %v1018
    %1359 = vmatpush1.bf16.msra.mxu0 %v1017
    %1360 = vmatprep.subr.bf16.mxu0 %v1022
    %1361 = vmatpush1.bf16.msra.mxu0 %v1021
    %1362 = vmatprep.subr.bf16.mxu0 %v1026
    %1363 = vmatpush1.bf16.msra.mxu0 %v1025
    %1364 = vmatprep.subr.bf16.mxu0 %v1030
    %1365 = vmatpush1.bf16.msra.mxu0 %v1029
    %1366 = vmatprep.subr.bf16.mxu0 %v1034
    %1367 = vmatpush1.bf16.msra.mxu0 %v1033
    %1368 = vmatprep.subr.bf16.mxu0 %v1038
    %1369 = vmatpush1.bf16.msra.mxu0 %v1037
    %1370 = vmatprep.mubr.bf16.mxu0 %v330
    %1371 = vmatmul.mubr.bf16.gmra.mrb[0].mxu0 %v329
    %v1372 = vpop.f32.mrb[0].mxu0
    %v1373 = vadd.f32 %v1332, %v1372
    %v1374 = vpop.f32.mrb[0].mxu0
    %v1375 = vadd.f32 %v1334, %v1374
    %v1376 = vpop.f32.mrb[0].mxu0
    %v1377 = vpop.f32.mrb[0].mxu0
    %1378 = vdwg.mxu0
    %1379 = vmatprep.subr.bf16.mxu0 %v1042
    %1380 = vmatpush1.bf16.msra.mxu0 %v1041
    %1381 = vmatprep.subr.bf16.mxu0 %v1046
    %1382 = vmatpush1.bf16.msra.mxu0 %v1045
    %1383 = vmatprep.subr.bf16.mxu0 %v1050
    %1384 = vmatpush1.bf16.msra.mxu0 %v1049
    %1385 = vmatprep.subr.bf16.mxu0 %v1054
    %1386 = vmatpush1.bf16.msra.mxu0 %v1053
    %1387 = vmatprep.subr.bf16.mxu0 %v1058
    %1388 = vmatpush1.bf16.msra.mxu0 %v1057
    %1389 = vmatprep.subr.bf16.mxu0 %v1062
    %1390 = vmatpush1.bf16.msra.mxu0 %v1061
    %1391 = vmatprep.subr.bf16.mxu0 %v1066
    %1392 = vmatpush1.bf16.msra.mxu0 %v1065
    %1393 = vmatprep.subr.bf16.mxu0 %v1070
    %1394 = vmatpush1.bf16.msra.mxu0 %v1069
    %1395 = vmatprep.subr.bf16.mxu0 %v1074
    %1396 = vmatpush1.bf16.msra.mxu0 %v1073
    %1397 = vmatprep.subr.bf16.mxu0 %v1078
    %1398 = vmatpush1.bf16.msra.mxu0 %v1077
    %1399 = vmatprep.subr.bf16.mxu0 %v1082
    %1400 = vmatpush1.bf16.msra.mxu0 %v1081
    %1401 = vmatprep.subr.bf16.mxu0 %v1086
    %1402 = vmatpush1.bf16.msra.mxu0 %v1085
    %1403 = vmatprep.subr.bf16.mxu0 %v1090
    %1404 = vmatpush1.bf16.msra.mxu0 %v1089
    %1405 = vmatprep.subr.bf16.mxu0 %v1094
    %1406 = vmatpush1.bf16.msra.mxu0 %v1093
    %1407 = vmatprep.subr.bf16.mxu0 %v1098
    %1408 = vmatpush1.bf16.msra.mxu0 %v1097
    %1409 = vmatprep.subr.bf16.mxu0 %v1102
    %1410 = vmatpush1.bf16.msra.mxu0 %v1101
    %1411 = vmatprep.mubr.bf16.mxu0 %v328
    %1412 = vmatmul.mubr.bf16.gmra.mrb[0].mxu0 %v314
    %v1413 = vpop.f32.mrb[0].mxu0
    %v1414 = vadd.f32 %v1373, %v1413
    %v1415 = vpop.f32.mrb[0].mxu0
    %v1416 = vadd.f32 %v1375, %v1415
    %v1417 = vpop.f32.mrb[0].mxu0
    %v1418 = vpop.f32.mrb[0].mxu0
    %1419 = vdwg.mxu0
    %1420 = vmatprep.subr.bf16.mxu0 %v916
    %1421 = vmatpush1.bf16.msra.mxu0 %v915
    %1422 = vmatprep.subr.bf16.mxu0 %v920
    %1423 = vmatpush1.bf16.msra.mxu0 %v919
    %1424 = vmatprep.subr.bf16.mxu0 %v924
    %1425 = vmatpush1.bf16.msra.mxu0 %v923
    %1426 = vmatprep.subr.bf16.mxu0 %v928
    %1427 = vmatpush1.bf16.msra.mxu0 %v927
    %1428 = vmatprep.subr.bf16.mxu0 %v932
    %1429 = vmatpush1.bf16.msra.mxu0 %v931
    %1430 = vmatprep.subr.bf16.mxu0 %v936
    %1431 = vmatpush1.bf16.msra.mxu0 %v935
    %1432 = vmatprep.subr.bf16.mxu0 %v940
    %1433 = vmatpush1.bf16.msra.mxu0 %v939
    %1434 = vmatprep.subr.bf16.mxu0 %v944
    %1435 = vmatpush1.bf16.msra.mxu0 %v943
    %1436 = vmatprep.subr.bf16.mxu0 %v948
    %1437 = vmatpush1.bf16.msra.mxu0 %v947
    %1438 = vmatprep.subr.bf16.mxu0 %v952
    %1439 = vmatpush1.bf16.msra.mxu0 %v951
    %1440 = vmatprep.subr.bf16.mxu0 %v956
    %1441 = vmatpush1.bf16.msra.mxu0 %v955
    %1442 = vmatprep.subr.bf16.mxu0 %v960
    %1443 = vmatpush1.bf16.msra.mxu0 %v959
    %1444 = vmatprep.subr.bf16.mxu0 %v964
    %1445 = vmatpush1.bf16.msra.mxu0 %v963
    %1446 = vmatprep.subr.bf16.mxu0 %v968
    %1447 = vmatpush1.bf16.msra.mxu0 %v967
    %1448 = vmatprep.subr.bf16.mxu0 %v972
    %1449 = vmatpush1.bf16.msra.mxu0 %v971
    %1450 = vmatprep.subr.bf16.mxu0 %v976
    %1451 = vmatpush1.bf16.msra.mxu0 %v975
    %1452 = vmatprep.mubr.bf16.mxu0 %v321
    %1453 = vmatmul.mubr.bf16.gmra.mrb[0].mxu0 %v307
    %v1454 = vpop.f32.mrb[0].mxu0
    %v1455 = vadd.f32 %v274, %v1454
    %v1456 = vpop.f32.mrb[0].mxu0
    %v1457 = vadd.f32 %v278, %v1456
    %v1458 = vpop.f32.mrb[0].mxu0
    %v1459 = vpop.f32.mrb[0].mxu0
    %1460 = vdwg.mxu0
    %1461 = vmatprep.subr.bf16.mxu0 %v980
    %1462 = vmatpush1.bf16.msra.mxu0 %v979
    %1463 = vmatprep.subr.bf16.mxu0 %v984
    %1464 = vmatpush1.bf16.msra.mxu0 %v983
    %1465 = vmatprep.subr.bf16.mxu0 %v988
    %1466 = vmatpush1.bf16.msra.mxu0 %v987
    %1467 = vmatprep.subr.bf16.mxu0 %v992
    %1468 = vmatpush1.bf16.msra.mxu0 %v991
    %1469 = vmatprep.subr.bf16.mxu0 %v996
    %1470 = vmatpush1.bf16.msra.mxu0 %v995
    %1471 = vmatprep.subr.bf16.mxu0 %v1000
    %1472 = vmatpush1.bf16.msra.mxu0 %v999
    %1473 = vmatprep.subr.bf16.mxu0 %v1004
    %1474 = vmatpush1.bf16.msra.mxu0 %v1003
    %1475 = vmatprep.subr.bf16.mxu0 %v1008
    %1476 = vmatpush1.bf16.msra.mxu0 %v1007
    %1477 = vmatprep.subr.bf16.mxu0 %v1012
    %1478 = vmatpush1.bf16.msra.mxu0 %v1011
    %1479 = vmatprep.subr.bf16.mxu0 %v1016
    %1480 = vmatpush1.bf16.msra.mxu0 %v1015
    %1481 = vmatprep.subr.bf16.mxu0 %v1020
    %1482 = vmatpush1.bf16.msra.mxu0 %v1019
    %1483 = vmatprep.subr.bf16.mxu0 %v1024
    %1484 = vmatpush1.bf16.msra.mxu0 %v1023
    %1485 = vmatprep.subr.bf16.mxu0 %v1028
    %1486 = vmatpush1.bf16.msra.mxu0 %v1027
    %1487 = vmatprep.subr.bf16.mxu0 %v1032
    %1488 = vmatpush1.bf16.msra.mxu0 %v1031
    %1489 = vmatprep.subr.bf16.mxu0 %v1036
    %1490 = vmatpush1.bf16.msra.mxu0 %v1035
    %1491 = vmatprep.subr.bf16.mxu0 %v1040
    %1492 = vmatpush1.bf16.msra.mxu0 %v1039
    %1493 = vmatprep.mubr.bf16.mxu0 %v330
    %1494 = vmatmul.mubr.bf16.gmra.mrb[0].mxu0 %v329
    %v1495 = vpop.f32.mrb[0].mxu0
    %v1496 = vadd.f32 %v1455, %v1495
    %v1497 = vpop.f32.mrb[0].mxu0
    %v1498 = vadd.f32 %v1457, %v1497
    %v1499 = vpop.f32.mrb[0].mxu0
    %v1500 = vpop.f32.mrb[0].mxu0
    %1501 = vdwg.mxu0
    %1502 = vmatprep.subr.bf16.mxu0 %v1044
    %1503 = vmatpush1.bf16.msra.mxu0 %v1043
    %1504 = vmatprep.subr.bf16.mxu0 %v1048
    %1505 = vmatpush1.bf16.msra.mxu0 %v1047
    %1506 = vmatprep.subr.bf16.mxu0 %v1052
    %1507 = vmatpush1.bf16.msra.mxu0 %v1051
    %1508 = vmatprep.subr.bf16.mxu0 %v1056
    %1509 = vmatpush1.bf16.msra.mxu0 %v1055
    %1510 = vmatprep.subr.bf16.mxu0 %v1060
    %1511 = vmatpush1.bf16.msra.mxu0 %v1059
    %1512 = vmatprep.subr.bf16.mxu0 %v1064
    %1513 = vmatpush1.bf16.msra.mxu0 %v1063
    %1514 = vmatprep.subr.bf16.mxu0 %v1068
    %1515 = vmatpush1.bf16.msra.mxu0 %v1067
    %1516 = vmatprep.subr.bf16.mxu0 %v1072
    %1517 = vmatpush1.bf16.msra.mxu0 %v1071
    %1518 = vmatprep.subr.bf16.mxu0 %v1076
    %1519 = vmatpush1.bf16.msra.mxu0 %v1075
    %1520 = vmatprep.subr.bf16.mxu0 %v1080
    %1521 = vmatpush1.bf16.msra.mxu0 %v1079
    %1522 = vmatprep.subr.bf16.mxu0 %v1084
    %1523 = vmatpush1.bf16.msra.mxu0 %v1083
    %1524 = vmatprep.subr.bf16.mxu0 %v1088
    %1525 = vmatpush1.bf16.msra.mxu0 %v1087
    %1526 = vmatprep.subr.bf16.mxu0 %v1092
    %1527 = vmatpush1.bf16.msra.mxu0 %v1091
    %1528 = vmatprep.subr.bf16.mxu0 %v1096
    %1529 = vmatpush1.bf16.msra.mxu0 %v1095
    %1530 = vmatprep.subr.bf16.mxu0 %v1100
    %1531 = vmatpush1.bf16.msra.mxu0 %v1099
    %1532 = vmatprep.subr.bf16.mxu0 %v1104
    %1533 = vmatpush1.bf16.msra.mxu0 %v1103
    %1534 = vmatprep.mubr.bf16.mxu0 %v328
    %1535 = vmatmul.mubr.bf16.gmra.mrb[0].mxu0 %v314
    %v1536 = vpop.f32.mrb[0].mxu0
    %v1537 = vadd.f32 %v1496, %v1536
    %v1538 = vpop.f32.mrb[0].mxu0
    %v1539 = vadd.f32 %v1498, %v1538
    %v1540 = vpop.f32.mrb[0].mxu0
    %v1541 = vpop.f32.mrb[0].mxu0
    %1542 = vdwg.mxu0
    %v1543 = vmax.f32 %v1414, 0.0
    %v1544 = vmax.f32 %v1416, 0.0
    %v1545 = vmax.f32 %v1537, 0.0
    %v1546 = vmax.f32 %v1539, 0.0
    %v1547 = vpack.c.bf16 %v1543, %v1543
    %v1548 = vpack.c.bf16 %v1544, %v1544
    %v1549 = vpack.c.bf16 %v1545, %v1545
    %v1550 = vpack.c.bf16 %v1546, %v1546
    %v1551 = vld [vmem:[#allocation4] sm:$0xff]
    %v1552 = vld [vmem:[#allocation4 + $0x8] sm:$0xff]
    %v1553 = vld [vmem:[#allocation4 + $0x10] sm:$0xff]
    %v1554 = vld [vmem:[#allocation4 + $0x18] sm:$0xff]
    %v1555 = vld [vmem:[#allocation4 + $0x20] sm:$0xff]
    %v1556 = vld [vmem:[#allocation4 + $0x28] sm:$0xff]
    %v1557 = vld [vmem:[#allocation4 + $0x30] sm:$0xff]
    %v1558 = vld [vmem:[#allocation4 + $0x38] sm:$0xff]
    %v1559 = vld [vmem:[#allocation4 + $0x40] sm:$0xff]
    %v1560 = vld [vmem:[#allocation4 + $0x48] sm:$0xff]
    %v1561 = vld [vmem:[#allocation4 + $0x50] sm:$0xff]
    %v1562 = vld [vmem:[#allocation4 + $0x58] sm:$0xff]
    %v1563 = vld [vmem:[#allocation4 + $0x60] sm:$0xff]
    %v1564 = vld [vmem:[#allocation4 + $0x68] sm:$0xff]
    %v1565 = vld [vmem:[#allocation4 + $0x70] sm:$0xff]
    %v1566 = vld [vmem:[#allocation4 + $0x78] sm:$0xff]
    %v1567 = vld [vmem:[#allocation4 + $0x80] sm:$0xff]
    %v1568 = vld [vmem:[#allocation4 + $0x88] sm:$0xff]
    %v1569 = vld [vmem:[#allocation4 + $0x90] sm:$0xff]
    %v1570 = vld [vmem:[#allocation4 + $0x98] sm:$0xff]
    %v1571 = vld [vmem:[#allocation4 + $0xa0] sm:$0xff]
    %v1572 = vld [vmem:[#allocation4 + $0xa8] sm:$0xff]
    %v1573 = vld [vmem:[#allocation4 + $0xb0] sm:$0xff]
    %v1574 = vld [vmem:[#allocation4 + $0xb8] sm:$0xff]
    %v1575 = vld [vmem:[#allocation4 + $0xc0] sm:$0xff]
    %v1576 = vld [vmem:[#allocation4 + $0xc8] sm:$0xff]
    %v1577 = vld [vmem:[#allocation4 + $0xd0] sm:$0xff]
    %v1578 = vld [vmem:[#allocation4 + $0xd8] sm:$0xff]
    %v1579 = vld [vmem:[#allocation4 + $0xe0] sm:$0xff]
    %v1580 = vld [vmem:[#allocation4 + $0xe8] sm:$0xff]
    %v1581 = vld [vmem:[#allocation4 + $0xf0] sm:$0xff]
    %v1582 = vld [vmem:[#allocation4 + $0xf8] sm:$0xff]
    %v1583 = vld [vmem:[#allocation4 + $0x100] sm:$0xff]
    %v1584 = vld [vmem:[#allocation4 + $0x108] sm:$0xff]
    %v1585 = vld [vmem:[#allocation4 + $0x110] sm:$0xff]
    %v1586 = vld [vmem:[#allocation4 + $0x118] sm:$0xff]
    %v1587 = vld [vmem:[#allocation4 + $0x120] sm:$0xff]
    %v1588 = vld [vmem:[#allocation4 + $0x128] sm:$0xff]
    %v1589 = vld [vmem:[#allocation4 + $0x130] sm:$0xff]
    %v1590 = vld [vmem:[#allocation4 + $0x138] sm:$0xff]
    %v1591 = vld [vmem:[#allocation4 + $0x140] sm:$0xff]
    %v1592 = vld [vmem:[#allocation4 + $0x148] sm:$0xff]
    %v1593 = vld [vmem:[#allocation4 + $0x150] sm:$0xff]
    %v1594 = vld [vmem:[#allocation4 + $0x158] sm:$0xff]
    %v1595 = vld [vmem:[#allocation4 + $0x160] sm:$0xff]
    %v1596 = vld [vmem:[#allocation4 + $0x168] sm:$0xff]
    %v1597 = vld [vmem:[#allocation4 + $0x170] sm:$0xff]
    %v1598 = vld [vmem:[#allocation4 + $0x178] sm:$0xff]
    %v1599 = vld [vmem:[#allocation4 + $0x180] sm:$0xff]
    %v1600 = vld [vmem:[#allocation4 + $0x188] sm:$0xff]
    %v1601 = vld [vmem:[#allocation4 + $0x190] sm:$0xff]
    %v1602 = vld [vmem:[#allocation4 + $0x198] sm:$0xff]
    %v1603 = vld [vmem:[#allocation4 + $0x1a0] sm:$0xff]
    %v1604 = vld [vmem:[#allocation4 + $0x1a8] sm:$0xff]
    %v1605 = vld [vmem:[#allocation4 + $0x1b0] sm:$0xff]
    %v1606 = vld [vmem:[#allocation4 + $0x1b8] sm:$0xff]
    %v1607 = vld [vmem:[#allocation4 + $0x1c0] sm:$0xff]
    %v1608 = vld [vmem:[#allocation4 + $0x1c8] sm:$0xff]
    %v1609 = vld [vmem:[#allocation4 + $0x1d0] sm:$0xff]
    %v1610 = vld [vmem:[#allocation4 + $0x1d8] sm:$0xff]
    %v1611 = vld [vmem:[#allocation4 + $0x1e0] sm:$0xff]
    %v1612 = vld [vmem:[#allocation4 + $0x1e8] sm:$0xff]
    %v1613 = vld [vmem:[#allocation4 + $0x1f0] sm:$0xff]
    %v1614 = vld [vmem:[#allocation4 + $0x1f8] sm:$0xff]
    %v1615 = vld [vmem:[%s4] sm:$0x3]
    %v1617 = vlaneseq
    %v1618 = vshrl.u32 %v1617, 7
    %v1619 = vsub.s32 0, %v1618
    %v1620 = vrot.slane %v1615, %v1619
    %v1621 = vlaneseq
    %v1622 = vshrl.u32 %v1621, 7
    %v1623 = vsub.s32 1, %v1622
    %v1624 = vrot.slane %v1615, %v1623
    %v1691 = vunpack.c.l.b16 %v1551
    %v1692 = vunpack.c.h.b16 %v1551
    %v1693 = vunpack.c.l.b16 %v1552
    %v1694 = vunpack.c.h.b16 %v1552
    %v1695 = vunpack.c.l.b16 %v1553
    %v1696 = vunpack.c.h.b16 %v1553
    %v1697 = vunpack.c.l.b16 %v1554
    %v1698 = vunpack.c.h.b16 %v1554
    %v1699 = vunpack.c.l.b16 %v1555
    %v1700 = vunpack.c.h.b16 %v1555
    %v1701 = vunpack.c.l.b16 %v1556
    %v1702 = vunpack.c.h.b16 %v1556
    %v1703 = vunpack.c.l.b16 %v1557
    %v1704 = vunpack.c.h.b16 %v1557
    %v1705 = vunpack.c.l.b16 %v1558
    %v1706 = vunpack.c.h.b16 %v1558
    %v1707 = vunpack.c.l.b16 %v1559
    %v1708 = vunpack.c.h.b16 %v1559
    %v1709 = vunpack.c.l.b16 %v1560
    %v1710 = vunpack.c.h.b16 %v1560
    %v1711 = vunpack.c.l.b16 %v1561
    %v1712 = vunpack.c.h.b16 %v1561
    %v1713 = vunpack.c.l.b16 %v1562
    %v1714 = vunpack.c.h.b16 %v1562
    %v1715 = vunpack.c.l.b16 %v1563
    %v1716 = vunpack.c.h.b16 %v1563
    %v1717 = vunpack.c.l.b16 %v1564
    %v1718 = vunpack.c.h.b16 %v1564
    %v1719 = vunpack.c.l.b16 %v1565
    %v1720 = vunpack.c.h.b16 %v1565
    %v1721 = vunpack.c.l.b16 %v1566
    %v1722 = vunpack.c.h.b16 %v1566
    %v1723 = vunpack.c.l.b16 %v1567
    %v1724 = vunpack.c.h.b16 %v1567
    %v1725 = vunpack.c.l.b16 %v1568
    %v1726 = vunpack.c.h.b16 %v1568
    %v1727 = vunpack.c.l.b16 %v1569
    %v1728 = vunpack.c.h.b16 %v1569
    %v1729 = vunpack.c.l.b16 %v1570
    %v1730 = vunpack.c.h.b16 %v1570
    %v1731 = vunpack.c.l.b16 %v1571
    %v1732 = vunpack.c.h.b16 %v1571
    %v1733 = vunpack.c.l.b16 %v1572
    %v1734 = vunpack.c.h.b16 %v1572
    %v1735 = vunpack.c.l.b16 %v1573
    %v1736 = vunpack.c.h.b16 %v1573
    %v1737 = vunpack.c.l.b16 %v1574
    %v1738 = vunpack.c.h.b16 %v1574
    %v1739 = vunpack.c.l.b16 %v1575
    %v1740 = vunpack.c.h.b16 %v1575
    %v1741 = vunpack.c.l.b16 %v1576
    %v1742 = vunpack.c.h.b16 %v1576
    %v1743 = vunpack.c.l.b16 %v1577
    %v1744 = vunpack.c.h.b16 %v1577
    %v1745 = vunpack.c.l.b16 %v1578
    %v1746 = vunpack.c.h.b16 %v1578
    %v1747 = vunpack.c.l.b16 %v1579
    %v1748 = vunpack.c.h.b16 %v1579
    %v1749 = vunpack.c.l.b16 %v1580
    %v1750 = vunpack.c.h.b16 %v1580
    %v1751 = vunpack.c.l.b16 %v1581
    %v1752 = vunpack.c.h.b16 %v1581
    %v1753 = vunpack.c.l.b16 %v1582
    %v1754 = vunpack.c.h.b16 %v1582
    %v1755 = vunpack.c.l.b16 %v1583
    %v1756 = vunpack.c.h.b16 %v1583
    %v1757 = vunpack.c.l.b16 %v1584
    %v1758 = vunpack.c.h.b16 %v1584
    %v1759 = vunpack.c.l.b16 %v1585
    %v1760 = vunpack.c.h.b16 %v1585
    %v1761 = vunpack.c.l.b16 %v1586
    %v1762 = vunpack.c.h.b16 %v1586
    %v1763 = vunpack.c.l.b16 %v1587
    %v1764 = vunpack.c.h.b16 %v1587
    %v1765 = vunpack.c.l.b16 %v1588
    %v1766 = vunpack.c.h.b16 %v1588
    %v1767 = vunpack.c.l.b16 %v1589
    %v1768 = vunpack.c.h.b16 %v1589
    %v1769 = vunpack.c.l.b16 %v1590
    %v1770 = vunpack.c.h.b16 %v1590
    %v1771 = vunpack.c.l.b16 %v1591
    %v1772 = vunpack.c.h.b16 %v1591
    %v1773 = vunpack.c.l.b16 %v1592
    %v1774 = vunpack.c.h.b16 %v1592
    %v1775 = vunpack.c.l.b16 %v1593
    %v1776 = vunpack.c.h.b16 %v1593
    %v1777 = vunpack.c.l.b16 %v1594
    %v1778 = vunpack.c.h.b16 %v1594
    %v1779 = vunpack.c.l.b16 %v1595
    %v1780 = vunpack.c.h.b16 %v1595
    %v1781 = vunpack.c.l.b16 %v1596
    %v1782 = vunpack.c.h.b16 %v1596
    %v1783 = vunpack.c.l.b16 %v1597
    %v1784 = vunpack.c.h.b16 %v1597
    %v1785 = vunpack.c.l.b16 %v1598
    %v1786 = vunpack.c.h.b16 %v1598
    %v1787 = vunpack.c.l.b16 %v1599
    %v1788 = vunpack.c.h.b16 %v1599
    %v1789 = vunpack.c.l.b16 %v1600
    %v1790 = vunpack.c.h.b16 %v1600
    %v1791 = vunpack.c.l.b16 %v1601
    %v1792 = vunpack.c.h.b16 %v1601
    %v1793 = vunpack.c.l.b16 %v1602
    %v1794 = vunpack.c.h.b16 %v1602
    %v1795 = vunpack.c.l.b16 %v1603
    %v1796 = vunpack.c.h.b16 %v1603
    %v1797 = vunpack.c.l.b16 %v1604
    %v1798 = vunpack.c.h.b16 %v1604
    %v1799 = vunpack.c.l.b16 %v1605
    %v1800 = vunpack.c.h.b16 %v1605
    %v1801 = vunpack.c.l.b16 %v1606
    %v1802 = vunpack.c.h.b16 %v1606
    %v1803 = vunpack.c.l.b16 %v1607
    %v1804 = vunpack.c.h.b16 %v1607
    %v1805 = vunpack.c.l.b16 %v1608
    %v1806 = vunpack.c.h.b16 %v1608
    %v1807 = vunpack.c.l.b16 %v1609
    %v1808 = vunpack.c.h.b16 %v1609
    %v1809 = vunpack.c.l.b16 %v1610
    %v1810 = vunpack.c.h.b16 %v1610
    %v1811 = vunpack.c.l.b16 %v1611
    %v1812 = vunpack.c.h.b16 %v1611
    %v1813 = vunpack.c.l.b16 %v1612
    %v1814 = vunpack.c.h.b16 %v1612
    %v1815 = vunpack.c.l.b16 %v1613
    %v1816 = vunpack.c.h.b16 %v1613
    %v1817 = vunpack.c.l.b16 %v1614
    %v1818 = vunpack.c.h.b16 %v1614
    %v1819 = vpack.c.b16 %v1693, %v1691
    %v1820 = vpack.c.b16 %v1694, %v1692
    %v1821 = vpack.c.b16 %v1697, %v1695
    %v1822 = vpack.c.b16 %v1698, %v1696
    %v1823 = vpack.c.b16 %v1701, %v1699
    %v1824 = vpack.c.b16 %v1702, %v1700
    %v1825 = vpack.c.b16 %v1705, %v1703
    %v1826 = vpack.c.b16 %v1706, %v1704
    %v1827 = vpack.c.b16 %v1709, %v1707
    %v1828 = vpack.c.b16 %v1710, %v1708
    %v1829 = vpack.c.b16 %v1713, %v1711
    %v1830 = vpack.c.b16 %v1714, %v1712
    %v1831 = vpack.c.b16 %v1717, %v1715
    %v1832 = vpack.c.b16 %v1718, %v1716
    %v1833 = vpack.c.b16 %v1721, %v1719
    %v1834 = vpack.c.b16 %v1722, %v1720
    %v1835 = vpack.c.b16 %v1725, %v1723
    %v1836 = vpack.c.b16 %v1726, %v1724
    %v1837 = vpack.c.b16 %v1729, %v1727
    %v1838 = vpack.c.b16 %v1730, %v1728
    %v1839 = vpack.c.b16 %v1733, %v1731
    %v1840 = vpack.c.b16 %v1734, %v1732
    %v1841 = vpack.c.b16 %v1737, %v1735
    %v1842 = vpack.c.b16 %v1738, %v1736
    %v1843 = vpack.c.b16 %v1741, %v1739
    %v1844 = vpack.c.b16 %v1742, %v1740
    %v1845 = vpack.c.b16 %v1745, %v1743
    %v1846 = vpack.c.b16 %v1746, %v1744
    %v1847 = vpack.c.b16 %v1749, %v1747
    %v1848 = vpack.c.b16 %v1750, %v1748
    %v1849 = vpack.c.b16 %v1753, %v1751
    %v1850 = vpack.c.b16 %v1754, %v1752
    %v1851 = vpack.c.b16 %v1757, %v1755
    %v1852 = vpack.c.b16 %v1758, %v1756
    %v1853 = vpack.c.b16 %v1761, %v1759
    %v1854 = vpack.c.b16 %v1762, %v1760
    %v1855 = vpack.c.b16 %v1765, %v1763
    %v1856 = vpack.c.b16 %v1766, %v1764
    %v1857 = vpack.c.b16 %v1769, %v1767
    %v1858 = vpack.c.b16 %v1770, %v1768
    %v1859 = vpack.c.b16 %v1773, %v1771
    %v1860 = vpack.c.b16 %v1774, %v1772
    %v1861 = vpack.c.b16 %v1777, %v1775
    %v1862 = vpack.c.b16 %v1778, %v1776
    %v1863 = vpack.c.b16 %v1781, %v1779
    %v1864 = vpack.c.b16 %v1782, %v1780
    %v1865 = vpack.c.b16 %v1785, %v1783
    %v1866 = vpack.c.b16 %v1786, %v1784
    %v1867 = vpack.c.b16 %v1789, %v1787
    %v1868 = vpack.c.b16 %v1790, %v1788
    %v1869 = vpack.c.b16 %v1793, %v1791
    %v1870 = vpack.c.b16 %v1794, %v1792
    %v1871 = vpack.c.b16 %v1797, %v1795
    %v1872 = vpack.c.b16 %v1798, %v1796
    %v1873 = vpack.c.b16 %v1801, %v1799
    %v1874 = vpack.c.b16 %v1802, %v1800
    %v1875 = vpack.c.b16 %v1805, %v1803
    %v1876 = vpack.c.b16 %v1806, %v1804
    %v1877 = vpack.c.b16 %v1809, %v1807
    %v1878 = vpack.c.b16 %v1810, %v1808
    %v1879 = vpack.c.b16 %v1813, %v1811
    %v1880 = vpack.c.b16 %v1814, %v1812
    %v1881 = vpack.c.b16 %v1817, %v1815
    %v1882 = vpack.c.b16 %v1818, %v1816
    %1947 = vmatprep.subr.bf16.mxu0 %v1820
    %1948 = vmatpush1.bf16.msra.mxu0 %v1819
    %1949 = vmatprep.subr.bf16.mxu0 %v1822
    %1950 = vmatpush1.bf16.msra.mxu0 %v1821
    %1951 = vmatprep.subr.bf16.mxu0 %v1824
    %1952 = vmatpush1.bf16.msra.mxu0 %v1823
    %1953 = vmatprep.subr.bf16.mxu0 %v1826
    %1954 = vmatpush1.bf16.msra.mxu0 %v1825
    %1955 = vmatprep.subr.bf16.mxu0 %v1828
    %1956 = vmatpush1.bf16.msra.mxu0 %v1827
    %1957 = vmatprep.subr.bf16.mxu0 %v1830
    %1958 = vmatpush1.bf16.msra.mxu0 %v1829
    %1959 = vmatprep.subr.bf16.mxu0 %v1832
    %1960 = vmatpush1.bf16.msra.mxu0 %v1831
    %1961 = vmatprep.subr.bf16.mxu0 %v1834
    %1962 = vmatpush1.bf16.msra.mxu0 %v1833
    %1963 = vmatprep.subr.bf16.mxu0 %v1836
    %1964 = vmatpush1.bf16.msra.mxu0 %v1835
    %1965 = vmatprep.subr.bf16.mxu0 %v1838
    %1966 = vmatpush1.bf16.msra.mxu0 %v1837
    %1967 = vmatprep.subr.bf16.mxu0 %v1840
    %1968 = vmatpush1.bf16.msra.mxu0 %v1839
    %1969 = vmatprep.subr.bf16.mxu0 %v1842
    %1970 = vmatpush1.bf16.msra.mxu0 %v1841
    %1971 = vmatprep.subr.bf16.mxu0 %v1844
    %1972 = vmatpush1.bf16.msra.mxu0 %v1843
    %1973 = vmatprep.subr.bf16.mxu0 %v1846
    %1974 = vmatpush1.bf16.msra.mxu0 %v1845
    %1975 = vmatprep.subr.bf16.mxu0 %v1848
    %1976 = vmatpush1.bf16.msra.mxu0 %v1847
    %1977 = vmatprep.subr.bf16.mxu0 %v1850
    %1978 = vmatpush1.bf16.msra.mxu0 %v1849
    %1979 = vmatprep.mubr.bf16.mxu0 %v1548
    %1980 = vmatmul.mubr.bf16.gmra.mrb[0].mxu0 %v1547
    %v1981 = vpop.f32.mrb[0].mxu0
    %v1982 = vadd.f32 %v1620, %v1981
    %v1983 = vpop.f32.mrb[0].mxu0
    %v1984 = vadd.f32 %v1624, %v1983
    %v1985 = vpop.f32.mrb[0].mxu0
    %v1986 = vpop.f32.mrb[0].mxu0
    %1987 = vdwg.mxu0
    %1988 = vmatprep.subr.bf16.mxu0 %v1852
    %1989 = vmatpush1.bf16.msra.mxu0 %v1851
    %1990 = vmatprep.subr.bf16.mxu0 %v1854
    %1991 = vmatpush1.bf16.msra.mxu0 %v1853
    %1992 = vmatprep.subr.bf16.mxu0 %v1856
    %1993 = vmatpush1.bf16.msra.mxu0 %v1855
    %1994 = vmatprep.subr.bf16.mxu0 %v1858
    %1995 = vmatpush1.bf16.msra.mxu0 %v1857
    %1996 = vmatprep.subr.bf16.mxu0 %v1860
    %1997 = vmatpush1.bf16.msra.mxu0 %v1859
    %1998 = vmatprep.subr.bf16.mxu0 %v1862
    %1999 = vmatpush1.bf16.msra.mxu0 %v1861
    %2000 = vmatprep.subr.bf16.mxu0 %v1864
    %2001 = vmatpush1.bf16.msra.mxu0 %v1863
    %2002 = vmatprep.subr.bf16.mxu0 %v1866
    %2003 = vmatpush1.bf16.msra.mxu0 %v1865
    %2004 = vmatprep.subr.bf16.mxu0 %v1868
    %2005 = vmatpush1.bf16.msra.mxu0 %v1867
    %2006 = vmatprep.subr.bf16.mxu0 %v1870
    %2007 = vmatpush1.bf16.msra.mxu0 %v1869
    %2008 = vmatprep.subr.bf16.mxu0 %v1872
    %2009 = vmatpush1.bf16.msra.mxu0 %v1871
    %2010 = vmatprep.subr.bf16.mxu0 %v1874
    %2011 = vmatpush1.bf16.msra.mxu0 %v1873
    %2012 = vmatprep.subr.bf16.mxu0 %v1876
    %2013 = vmatpush1.bf16.msra.mxu0 %v1875
    %2014 = vmatprep.subr.bf16.mxu0 %v1878
    %2015 = vmatpush1.bf16.msra.mxu0 %v1877
    %2016 = vmatprep.subr.bf16.mxu0 %v1880
    %2017 = vmatpush1.bf16.msra.mxu0 %v1879
    %2018 = vmatprep.subr.bf16.mxu0 %v1882
    %2019 = vmatpush1.bf16.msra.mxu0 %v1881
    %2020 = vmatprep.mubr.bf16.mxu0 %v1550
    %2021 = vmatmul.mubr.bf16.gmra.mrb[0].mxu0 %v1549
    %v2022 = vpop.f32.mrb[0].mxu0
    %v2023 = vadd.f32 %v1982, %v2022
    %v2024 = vpop.f32.mrb[0].mxu0
    %v2025 = vadd.f32 %v1984, %v2024
    %v2026 = vpop.f32.mrb[0].mxu0
    %v2027 = vpop.f32.mrb[0].mxu0
    %2028 = vdwg.mxu0
    %v2029 = vmax.f32 %v2023, 0.0
    %v2030 = vmax.f32 %v2025, 0.0
    %v2031 = vpack.c.bf16 %v2029, %v2029
    %v2032 = vpack.c.bf16 %v2030, %v2030
    %v2033 = vld [vmem:[#allocation6] sm:$0xf]
    %v2034 = vld [vmem:[#allocation6 + $0x4] sm:$0xf]
    %v2035 = vld [vmem:[#allocation6 + $0x8] sm:$0xf]
    %v2036 = vld [vmem:[#allocation6 + $0xc] sm:$0xf]
    %v2037 = vld [vmem:[#allocation6 + $0x10] sm:$0xf]
    %v2038 = vld [vmem:[#allocation6 + $0x14] sm:$0xf]
    %v2039 = vld [vmem:[#allocation6 + $0x18] sm:$0xf]
    %v2040 = vld [vmem:[#allocation6 + $0x1c] sm:$0xf]
    %v2041 = vld [vmem:[#allocation6 + $0x20] sm:$0xf]
    %v2042 = vld [vmem:[#allocation6 + $0x24] sm:$0xf]
    %v2043 = vld [vmem:[#allocation6 + $0x28] sm:$0xf]
    %v2044 = vld [vmem:[#allocation6 + $0x2c] sm:$0xf]
    %v2045 = vld [vmem:[#allocation6 + $0x30] sm:$0xf]
    %v2046 = vld [vmem:[#allocation6 + $0x34] sm:$0xf]
    %v2047 = vld [vmem:[#allocation6 + $0x38] sm:$0xf]
    %v2048 = vld [vmem:[#allocation6 + $0x3c] sm:$0xf]
    %v2049 = vld [vmem:[#allocation6 + $0x40] sm:$0xf]
    %v2050 = vld [vmem:[#allocation6 + $0x44] sm:$0xf]
    %v2051 = vld [vmem:[#allocation6 + $0x48] sm:$0xf]
    %v2052 = vld [vmem:[#allocation6 + $0x4c] sm:$0xf]
    %v2053 = vld [vmem:[#allocation6 + $0x50] sm:$0xf]
    %v2054 = vld [vmem:[#allocation6 + $0x54] sm:$0xf]
    %v2055 = vld [vmem:[#allocation6 + $0x58] sm:$0xf]
    %v2056 = vld [vmem:[#allocation6 + $0x5c] sm:$0xf]
    %v2057 = vld [vmem:[#allocation6 + $0x60] sm:$0xf]
    %v2058 = vld [vmem:[#allocation6 + $0x64] sm:$0xf]
    %v2059 = vld [vmem:[#allocation6 + $0x68] sm:$0xf]
    %v2060 = vld [vmem:[#allocation6 + $0x6c] sm:$0xf]
    %v2061 = vld [vmem:[#allocation6 + $0x70] sm:$0xf]
    %v2062 = vld [vmem:[#allocation6 + $0x74] sm:$0xf]
    %v2063 = vld [vmem:[#allocation6 + $0x78] sm:$0xf]
    %v2064 = vld [vmem:[#allocation6 + $0x7c] sm:$0xf]
    %v2065 = vld [vmem:[%s6] sm:$0x1]
    %v2067 = vlaneseq
    %v2068 = vshrl.u32 %v2067, 7
    %v2069 = vsub.s32 0, %v2068
    %v2070 = vrot.slane %v2065, %v2069
    %v2104 = vunpack.c.l.b16 %v2033
    %v2105 = vunpack.c.l.b16 %v2034
    %v2106 = vunpack.c.l.b16 %v2035
    %v2107 = vunpack.c.l.b16 %v2036
    %v2108 = vunpack.c.l.b16 %v2037
    %v2109 = vunpack.c.l.b16 %v2038
    %v2110 = vunpack.c.l.b16 %v2039
    %v2111 = vunpack.c.l.b16 %v2040
    %v2112 = vunpack.c.l.b16 %v2041
    %v2113 = vunpack.c.l.b16 %v2042
    %v2114 = vunpack.c.l.b16 %v2043
    %v2115 = vunpack.c.l.b16 %v2044
    %v2116 = vunpack.c.l.b16 %v2045
    %v2117 = vunpack.c.l.b16 %v2046
    %v2118 = vunpack.c.l.b16 %v2047
    %v2119 = vunpack.c.l.b16 %v2048
    %v2120 = vunpack.c.l.b16 %v2049
    %v2121 = vunpack.c.l.b16 %v2050
    %v2122 = vunpack.c.l.b16 %v2051
    %v2123 = vunpack.c.l.b16 %v2052
    %v2124 = vunpack.c.l.b16 %v2053
    %v2125 = vunpack.c.l.b16 %v2054
    %v2126 = vunpack.c.l.b16 %v2055
    %v2127 = vunpack.c.l.b16 %v2056
    %v2128 = vunpack.c.l.b16 %v2057
    %v2129 = vunpack.c.l.b16 %v2058
    %v2130 = vunpack.c.l.b16 %v2059
    %v2131 = vunpack.c.l.b16 %v2060
    %v2132 = vunpack.c.l.b16 %v2061
    %v2133 = vunpack.c.l.b16 %v2062
    %v2134 = vunpack.c.l.b16 %v2063
    %v2135 = vunpack.c.l.b16 %v2064
    %v2136 = vpack.c.b16 %v2105, %v2104
    %v2137 = vpack.c.b16 %v2107, %v2106
    %v2138 = vpack.c.b16 %v2109, %v2108
    %v2139 = vpack.c.b16 %v2111, %v2110
    %v2140 = vpack.c.b16 %v2113, %v2112
    %v2141 = vpack.c.b16 %v2115, %v2114
    %v2142 = vpack.c.b16 %v2117, %v2116
    %v2143 = vpack.c.b16 %v2119, %v2118
    %v2144 = vpack.c.b16 %v2121, %v2120
    %v2145 = vpack.c.b16 %v2123, %v2122
    %v2146 = vpack.c.b16 %v2125, %v2124
    %v2147 = vpack.c.b16 %v2127, %v2126
    %v2148 = vpack.c.b16 %v2129, %v2128
    %v2149 = vpack.c.b16 %v2131, %v2130
    %v2150 = vpack.c.b16 %v2133, %v2132
    %v2151 = vpack.c.b16 %v2135, %v2134
    %2168 = vmatprep.subr.bf16.mxu0 0
    %2169 = vmatpush1.bf16.msra.mxu0 %v2136
    %2170 = vmatprep.subr.bf16.mxu0 0
    %2171 = vmatpush1.bf16.msra.mxu0 %v2137
    %2172 = vmatprep.subr.bf16.mxu0 0
    %2173 = vmatpush1.bf16.msra.mxu0 %v2138
    %2174 = vmatprep.subr.bf16.mxu0 0
    %2175 = vmatpush1.bf16.msra.mxu0 %v2139
    %2176 = vmatprep.subr.bf16.mxu0 0
    %2177 = vmatpush1.bf16.msra.mxu0 %v2140
    %2178 = vmatprep.subr.bf16.mxu0 0
    %2179 = vmatpush1.bf16.msra.mxu0 %v2141
    %2180 = vmatprep.subr.bf16.mxu0 0
    %2181 = vmatpush1.bf16.msra.mxu0 %v2142
    %2182 = vmatprep.subr.bf16.mxu0 0
    %2183 = vmatpush1.bf16.msra.mxu0 %v2143
    %2184 = vmatprep.subr.bf16.mxu0 0
    %2185 = vmatpush1.bf16.msra.mxu0 %v2144
    %2186 = vmatprep.subr.bf16.mxu0 0
    %2187 = vmatpush1.bf16.msra.mxu0 %v2145
    %2188 = vmatprep.subr.bf16.mxu0 0
    %2189 = vmatpush1.bf16.msra.mxu0 %v2146
    %2190 = vmatprep.subr.bf16.mxu0 0
    %2191 = vmatpush1.bf16.msra.mxu0 %v2147
    %2192 = vmatprep.subr.bf16.mxu0 0
    %2193 = vmatpush1.bf16.msra.mxu0 %v2148
    %2194 = vmatprep.subr.bf16.mxu0 0
    %2195 = vmatpush1.bf16.msra.mxu0 %v2149
    %2196 = vmatprep.subr.bf16.mxu0 0
    %2197 = vmatpush1.bf16.msra.mxu0 %v2150
    %2198 = vmatprep.subr.bf16.mxu0 0
    %2199 = vmatpush1.bf16.msra.mxu0 %v2151
    %2200 = vmatprep.mubr.bf16.mxu0 %v2032
    %2201 = vmatmul.mubr.bf16.gmra.mrb[0].mxu0 %v2031
    %v2202 = vpop.f32.mrb[0].mxu0
    %v2203 = vadd.f32 %v2070, %v2202
    %v2204 = vpop.f32.mrb[0].mxu0
    %v2205 = vpop.f32.mrb[0].mxu0
    %v2206 = vpop.f32.mrb[0].mxu0
    %2207 = vdwg.mxu0
    %v2208 = vpack.c.bf16 %v2203, %v2203
    %2209 = vst [vmem:[%s7] sm:$0x1] %v2208
    // Predicated region
    $region42: #{_model1_pallas.1} parent=1 // pred_check
      _
    $region43: #{_model1_pallas.1} parent=1 // pred_check_branch
      %2211 = sbr.rel (0) target = $region45
    $region44: #{_model1_pallas.1} parent=1 // pred_region
      _
    $region45: #{_model1_pallas.1} parent=1 // pred_fallthru
      _
    // Predicated region
    $region46: #{_model1_pallas.1} parent=1 // pred_check
      _
    $region47: #{_model1_pallas.1} parent=1 // pred_check_branch
      %2213 = sbr.rel (0) target = $region49
    $region48: #{_model1_pallas.1} parent=1 // pred_region
      _
    $region49: #{_model1_pallas.1} parent=1 // pred_fallthru
      _
    %2214 = vsyncpa [#allocation3], 1
    %2215 = vsyncpa [#allocation5], 1

</llo_original>
